<compile_context>
chip_gen: v6e
topology: v6e:2x2x1
jax: 0.10.0
libtpu: 0.0.40
codegen_flags: <defaults>
</compile_context>

<pallas_src>
import jax
import jax.numpy as jnp
from jax.experimental import pallas as pl
from jax.experimental.pallas import tpu as pltpu
import numpy as np


def _round_up(x, m):
    return (x + m - 1) // m * m


def _pad2(a, rows, cols):
    pr, pc = rows - a.shape[0], cols - a.shape[1]
    if pr or pc:
        a = jnp.pad(a, ((0, pr), (0, pc)))
    return a


def _pad3(a, n, c):
    pn, pc = n - a.shape[1], c - a.shape[2]
    if pn or pc:
        a = jnp.pad(a, ((0, 0), (0, pn), (0, pc)))
    return a


def gau_kernel(zft_ref, zfg_ref, xf_ref, mask_ref,
               wq_ref, bq_ref,            # query conv        (Cp, Cp) bf16, (1, Cp) f32
               wg_ref, bg_ref,            # g conv (BN folded)
               wf1_ref, wf2_ref, bf_ref,  # fi conv (BN folded, split for concat)
               out_ref):
    f32 = jnp.float32
    bf16 = jnp.bfloat16

    xf = xf_ref[0]        # (tnx, Cp)  bf16
    zf_t = zft_ref[0]     # (Nzp, Cp)  bf16  (precomputed support conv, padded rows = 0)
    zf_g = zfg_ref[0]     # (Nzp, Cp)  bf16  (precomputed g conv + ReLU, padded rows = 0)

    # xf-side 1x1 convs == channel matmuls (bf16 operands, f32 accumulation).
    xf_t = jnp.dot(xf, wq_ref[...], preferred_element_type=f32) + bq_ref[...]
    xf_g = jnp.maximum(
        jnp.dot(xf, wg_ref[...], preferred_element_type=f32) + bg_ref[...], 0.0)

    # similar[x, z] = sum_c xf_t[x, c] * zf_t[z, c]  (A @ B^T on the MXU; no
    # XLU transpose of zf_t).
    sim = jax.lax.dot_general(
        xf_t.astype(bf16), zf_t,
        dimension_numbers=(((1,), (1,)), ((), ())),
        preferred_element_type=f32)       # (tnx, Nzp) f32

    # Padded Nz columns: precomputed additive mask row (0 / -1e30), f32.
    sim = sim + mask_ref[...]

    # Numerically-stable softmax over Nz (f32 element-wise math).
    m = jnp.max(sim, axis=-1, keepdims=True)
    p = jnp.exp(sim - m)
    attn = p * pl.reciprocal(jnp.sum(p, axis=-1, keepdims=True), approx=True)

    # embedding = attn @ zf_g  -> (tnx, Cp)
    emb = jnp.dot(attn.astype(bf16), zf_g, preferred_element_type=f32)

    # concat([embedding, xf_g], channel) then fi 1x1 conv == split matmul.
    out = (jnp.dot(emb.astype(bf16), wf1_ref[...], preferred_element_type=f32)
           + jnp.dot(xf_g.astype(bf16), wf2_ref[...], preferred_element_type=f32)
           + bf_ref[...])
    out_ref[0] = jnp.maximum(out, 0.0).astype(out_ref.dtype)


def _vmem_cap_bytes():
    """Generation-aware VMEM cap: 0.7 x physical capacity, safe fallback."""
    try:
        cap = getattr(pltpu.get_tpu_info(), "vmem_capacity_bytes", None)
        if cap:
            return int(0.7 * cap)
    except Exception:
        pass
    return 48 << 20   # safe on every generation (v7x has 64 MiB/TC)


def _vmem_budget_bytes(tnx, nzp, cp, op):
    """Per-grid-step estimate: double-buffered I/O blocks, resident weights,
    f32 intermediates, 2x headroom, clamped to [8 MiB, 0.7 x chip VMEM]."""
    bf16, f32 = 2, 4
    io = 2 * (2 * nzp * cp * bf16          # zf_t, zf_g (resident per batch)
              + tnx * cp * bf16            # xf tile
              + tnx * op * bf16            # output tile (bf16)
              + nzp * f32)                 # mask row
    w = 2 * ((2 * cp * cp + 2 * cp * op) * bf16 + (2 * cp + op) * f32)
    interm = f32 * (3 * tnx * cp + 3 * tnx * nzp + tnx * op)
    est = 2 * (io + w + interm)
    return int(min(max(est, 8 << 20), _vmem_cap_bytes()))


def graph_attention_union(zf, xf, params, *, tnx=512):
    """zf, xf: NCHW float32. Returns NCHW (B, out_channel, Hx, Wx) float32."""
    B, C, Hz, Wz = zf.shape
    _, _, Hx, Wx = xf.shape
    Nz, Nx = Hz * Wz, Hx * Wx
    O = params["bf"].shape[-1]

    # Lane-dense padded sizes (multiples of 128 on every lane axis).
    Cp = _round_up(C, 128)
    Op = _round_up(O, 128)
    Nzp = _round_up(Nz, 128)

    # Tile height: multiple of 16 (bf16 sublane packing granule).
    tnx = max(16, _round_up(min(tnx, _round_up(Nx, 16)), 16))
    n_tiles = pl.cdiv(Nx, tnx)
    # Keep >= 2 grid steps when the search region is big enough to split, so a
    # 2-TC chip (v7x) gets work on both cores; harmless on 1-TC chips.
    if B * n_tiles < 2 and Nx > 256:
        tnx = _round_up(pl.cdiv(Nx, 2), 16)
        n_tiles = pl.cdiv(Nx, tnx)
    Nxp = n_tiles * tnx

    # ---- Hoisted zf-side work (tiny; removes 2 matmuls + ReLU per grid step).
    zf_plain = jnp.transpose(zf.reshape(B, C, Nz), (0, 2, 1))       # (B, Nz, C)
    zf_t = zf_plain @ params["ws"] + params["bs"]
    zf_g = jax.nn.relu(zf_plain @ params["wg"] + params["bg"])
    zf_t = _pad3(zf_t, Nzp, Cp).astype(jnp.bfloat16)                # padded rows = 0
    zf_g = _pad3(zf_g, Nzp, Cp).astype(jnp.bfloat16)

    # xf: NCHW -> (B, HW, C), zero-pad, cast bf16 (halves DMA bytes).
    xf_p = jnp.transpose(xf.reshape(B, C, Nx), (0, 2, 1))
    xf_p = _pad3(xf_p, Nxp, Cp).astype(jnp.bfloat16)

    # Additive softmax mask over padded Nz columns (kept in f32).
    col = jnp.arange(Nzp, dtype=jnp.int32)[None, :]
    mask = jnp.where(col < Nz, 0.0, -1e30).astype(jnp.float32)      # (1, Nzp)

    # Weights/biases: pad (only if needed); weights -> bf16, biases stay f32.
    wq = _pad2(params["wq"], Cp, Cp).astype(jnp.bfloat16)
    wg = _pad2(params["wg"], Cp, Cp).astype(jnp.bfloat16)
    wf1 = _pad2(params["wf1"], Cp, Op).astype(jnp.bfloat16)
    wf2 = _pad2(params["wf2"], Cp, Op).astype(jnp.bfloat16)
    bq = _pad2(params["bq"], 1, Cp)
    bg = _pad2(params["bg"], 1, Cp)
    bf = _pad2(params["bf"], 1, Op)

    grid = (B, n_tiles)

    def wspec(shape):
        # Constant index_map: weights/biases/mask stay resident in VMEM.
        return pl.BlockSpec(shape, lambda b, j: (0,) * len(shape))

    out = pl.pallas_call(
        gau_kernel,
        out_shape=jax.ShapeDtypeStruct((B, Nxp, Op), jnp.bfloat16),
        grid_spec=pltpu.PrefetchScalarGridSpec(
            num_scalar_prefetch=0,
            grid=grid,
            in_specs=[
                pl.BlockSpec((1, Nzp, Cp), lambda b, j: (b, 0, 0)),   # zf_t
                pl.BlockSpec((1, Nzp, Cp), lambda b, j: (b, 0, 0)),   # zf_g
                pl.BlockSpec((1, tnx, Cp), lambda b, j: (b, j, 0)),   # xf tile
                wspec((1, Nzp)),                                      # softmax mask
                wspec((Cp, Cp)), wspec((1, Cp)),                      # query
                wspec((Cp, Cp)), wspec((1, Cp)),                      # g (BN folded)
                wspec((Cp, Op)), wspec((Cp, Op)), wspec((1, Op)),     # fi (BN folded, split)
            ],
            out_specs=pl.BlockSpec((1, tnx, Op), lambda b, j: (b, j, 0)),
        ),
        compiler_params=pltpu.CompilerParams(
            dimension_semantics=("parallel", "parallel"),
            vmem_limit_bytes=_vmem_budget_bytes(tnx, Nzp, Cp, Op),
        ),
    )(zf_t, zf_g, xf_p, mask, wq, bq, wg, bg, wf1, wf2, bf)

    # Drop padding, cast back to f32, (B, Nx, O) -> NCHW.
    out = out[:, :Nx, :O].astype(jnp.float32)
    return jnp.transpose(out, (0, 2, 1)).reshape(B, O, Hx, Wx)


def make_params(key, in_channel, out_channel):
    """Deterministic synthetic parameters; BN (eval mode) folded into convs."""
    C, O = in_channel, out_channel
    ks = jax.random.split(key, 16)
    eps = 1e-5

    def conv_w(k, cin, cout, scale=0.2):
        return scale * jax.random.normal(k, (cin, cout), jnp.float32)  # (C_in, C_out)

    # query / support convs (weight + bias)
    wq = conv_w(ks[0], C, C); bq = 0.1 * jax.random.normal(ks[1], (1, C), jnp.float32)
    ws = conv_w(ks[2], C, C); bs = 0.1 * jax.random.normal(ks[3], (1, C), jnp.float32)

    # g = conv + BN + ReLU  (fold BN)
    wg = conv_w(ks[4], C, C); bg = 0.1 * jax.random.normal(ks[5], (1, C), jnp.float32)
    g_gamma = 1.0 + 0.1 * jax.random.normal(ks[6], (C,), jnp.float32)
    g_beta = 0.1 * jax.random.normal(ks[7], (C,), jnp.float32)
    g_mean = 0.1 * jax.random.normal(ks[8], (C,), jnp.float32)
    g_var = jnp.abs(jax.random.normal(ks[9], (C,), jnp.float32)) + 0.5
    g_scale = g_gamma / jnp.sqrt(g_var + eps)
    wg_f = wg * g_scale[None, :]
    bg_f = ((bg - g_mean[None, :]) * g_scale[None, :] + g_beta[None, :])

    # fi = conv(2C -> O) + BN + ReLU  (fold BN; split weight for [embedding, xf_g])
    wf = conv_w(ks[10], 2 * C, O); bf = 0.1 * jax.random.normal(ks[11], (1, O), jnp.float32)
    f_gamma = 1.0 + 0.1 * jax.random.normal(ks[12], (O,), jnp.float32)
    f_beta = 0.1 * jax.random.normal(ks[13], (O,), jnp.float32)
    f_mean = 0.1 * jax.random.normal(ks[14], (O,), jnp.float32)
    f_var = jnp.abs(jax.random.normal(ks[15], (O,), jnp.float32)) + 0.5
    f_scale = f_gamma / jnp.sqrt(f_var + eps)
    wf_f = wf * f_scale[None, :]
    bf_f = ((bf - f_mean[None, :]) * f_scale[None, :] + f_beta[None, :])

    return {
        "wq": wq, "bq": bq,
        "ws": ws, "bs": bs,
        "wg": wg_f, "bg": bg_f,
        "wf1": wf_f[:C, :], "wf2": wf_f[C:, :], "bf": bf_f,
    }


def reference_jax(zf, xf, p):
    """Pure-JAX f32 reference mirroring the PyTorch forward (NCHW)."""
    B, C, Hz, Wz = zf.shape
    _, _, Hx, Wx = xf.shape
    zf_p = jnp.transpose(zf.reshape(B, C, Hz * Wz), (0, 2, 1))
    xf_p = jnp.transpose(xf.reshape(B, C, Hx * Wx), (0, 2, 1))
    xf_t = xf_p @ p["wq"] + p["bq"]
    zf_t = zf_p @ p["ws"] + p["bs"]
    xf_g = jax.nn.relu(xf_p @ p["wg"] + p["bg"])
    zf_g = jax.nn.relu(zf_p @ p["wg"] + p["bg"])
    sim = jax.nn.softmax(jnp.einsum("bxc,bzc->bxz", xf_t, zf_t), axis=-1)
    emb = jnp.einsum("bxz,bzc->bxc", sim, zf_g)
    out = jax.nn.relu(emb @ p["wf1"] + xf_g @ p["wf2"] + p["bf"])
    O = p["bf"].shape[-1]
    return jnp.transpose(out, (0, 2, 1)).reshape(B, O, Hx, Wx)


if __name__ == "__main__":
    B, C, O = 2, 4, 8
    Hz = Wz = 8      # template (zf)
    Hx = Wx = 16     # search  (xf)

    key = jax.random.PRNGKey(0)
    k_zf, k_xf, k_p = jax.random.split(key, 3)
    zf = jax.random.normal(k_zf, (B, C, Hz, Wz), jnp.float32)
    xf = jax.random.normal(k_xf, (B, C, Hx, Wx), jnp.float32)
    params = make_params(k_p, C, O)

    # tnx=128 exercises the (batch, Nx-tile) grid even at these small shapes.
    out = graph_attention_union(zf, xf, params, tnx=128)
    out = jax.block_until_ready(out)

    ref = jax.block_until_ready(reference_jax(zf, xf, params))
    # Loosened tolerance: matmul operands and the kernel output are bf16
    # (f32 accumulation / element-wise math).
    np.testing.assert_allclose(np.asarray(out), np.asarray(ref), rtol=5e-2, atol=5e-2)

    assert out.shape == (B, O, Hx, Wx)
    print("KERNEL_OK")
</pallas_src>

<mosaic_0001>
module attributes {stable_mosaic.version = 11 : i64} {
  func.func @gau_kernel(%arg0: i32, %arg1: i32, %arg2: memref<1x128x128xbf16, #tpu.memory_space<vmem>>, %arg3: memref<1x128x128xbf16, #tpu.memory_space<vmem>>, %arg4: memref<1x128x128xbf16, #tpu.memory_space<vmem>>, %arg5: memref<1x128xf32, #tpu.memory_space<vmem>>, %arg6: memref<128x128xbf16, #tpu.memory_space<vmem>>, %arg7: memref<1x128xf32, #tpu.memory_space<vmem>>, %arg8: memref<128x128xbf16, #tpu.memory_space<vmem>>, %arg9: memref<1x128xf32, #tpu.memory_space<vmem>>, %arg10: memref<128x128xbf16, #tpu.memory_space<vmem>>, %arg11: memref<128x128xbf16, #tpu.memory_space<vmem>>, %arg12: memref<1x128xf32, #tpu.memory_space<vmem>>, %arg13: memref<1x128x128xbf16, #tpu.memory_space<vmem>>) attributes {dimension_semantics = [#tpu.dimension_semantics<parallel>, #tpu.dimension_semantics<parallel>], iteration_bounds = array<i64: 2, 2>, scalar_prefetch = 0 : i64, scratch_operands = 0 : i64, tpu.core_type = #tpu.core_type<tc>, window_params = [{transform_indices = @transform_0, window_bounds = array<i64: 1, 128, 128>}, {transform_indices = @transform_1, window_bounds = array<i64: 1, 128, 128>}, {transform_indices = @transform_2, window_bounds = array<i64: 1, 128, 128>}, {pipeline_mode = #tpu.pipeline_mode<synchronous>, transform_indices = @transform_3, window_bounds = array<i64: 1, 128>}, {pipeline_mode = #tpu.pipeline_mode<synchronous>, transform_indices = @transform_4, window_bounds = array<i64: 128, 128>}, {pipeline_mode = #tpu.pipeline_mode<synchronous>, transform_indices = @transform_5, window_bounds = array<i64: 1, 128>}, {pipeline_mode = #tpu.pipeline_mode<synchronous>, transform_indices = @transform_6, window_bounds = array<i64: 128, 128>}, {pipeline_mode = #tpu.pipeline_mode<synchronous>, transform_indices = @transform_7, window_bounds = array<i64: 1, 128>}, {pipeline_mode = #tpu.pipeline_mode<synchronous>, transform_indices = @transform_8, window_bounds = array<i64: 128, 128>}, {pipeline_mode = #tpu.pipeline_mode<synchronous>, transform_indices = @transform_9, window_bounds = array<i64: 128, 128>}, {pipeline_mode = #tpu.pipeline_mode<synchronous>, transform_indices = @transform_10, window_bounds = array<i64: 1, 128>}, {transform_indices = @transform_11, window_bounds = array<i64: 1, 128, 128>}]} {
    %c0 = arith.constant 0 : index
    %c0_0 = arith.constant 0 : index
    %c0_1 = arith.constant 0 : index
    %0 = vector.load %arg4[%c0, %c0_0, %c0_1] : memref<1x128x128xbf16, #tpu.memory_space<vmem>>, vector<1x128x128xbf16>
    %1 = vector.shape_cast %0 : vector<1x128x128xbf16> to vector<128x128xbf16>
    %c0_2 = arith.constant 0 : index
    %c0_3 = arith.constant 0 : index
    %c0_4 = arith.constant 0 : index
    %2 = vector.load %arg2[%c0_2, %c0_3, %c0_4] : memref<1x128x128xbf16, #tpu.memory_space<vmem>>, vector<1x128x128xbf16>
    %3 = vector.shape_cast %2 : vector<1x128x128xbf16> to vector<128x128xbf16>
    %c0_5 = arith.constant 0 : index
    %c0_6 = arith.constant 0 : index
    %c0_7 = arith.constant 0 : index
    %4 = vector.load %arg3[%c0_5, %c0_6, %c0_7] : memref<1x128x128xbf16, #tpu.memory_space<vmem>>, vector<1x128x128xbf16>
    %5 = vector.shape_cast %4 : vector<1x128x128xbf16> to vector<128x128xbf16>
    %c0_8 = arith.constant 0 : index
    %c0_9 = arith.constant 0 : index
    %6 = vector.load %arg6[%c0_8, %c0_9] : memref<128x128xbf16, #tpu.memory_space<vmem>>, vector<128x128xbf16>
    %cst = arith.constant dense<0.000000e+00> : vector<128x128xf32>
    %7 = tpu.matmul %1, %6, %cst {dimension_numbers = #tpu.dot_dimension_numbers<[1], [0], [0], [1], [0, 0, 1, 1], [], []>} : vector<128x128xbf16>, vector<128x128xbf16>, vector<128x128xf32> -> vector<128x128xf32>
    %c0_10 = arith.constant 0 : index
    %c0_11 = arith.constant 0 : index
    %8 = vector.load %arg7[%c0_10, %c0_11] : memref<1x128xf32, #tpu.memory_space<vmem>>, vector<1x128xf32>
    %9 = vector.broadcast %8 : vector<1x128xf32> to vector<128x128xf32>
    %10 = arith.addf %7, %9 : vector<128x128xf32>
    %c0_12 = arith.constant 0 : index
    %c0_13 = arith.constant 0 : index
    %11 = vector.load %arg8[%c0_12, %c0_13] : memref<128x128xbf16, #tpu.memory_space<vmem>>, vector<128x128xbf16>
    %cst_14 = arith.constant dense<0.000000e+00> : vector<128x128xf32>
    %12 = tpu.matmul %1, %11, %cst_14 {dimension_numbers = #tpu.dot_dimension_numbers<[1], [0], [0], [1], [0, 0, 1, 1], [], []>} : vector<128x128xbf16>, vector<128x128xbf16>, vector<128x128xf32> -> vector<128x128xf32>
    %c0_15 = arith.constant 0 : index
    %c0_16 = arith.constant 0 : index
    %13 = vector.load %arg9[%c0_15, %c0_16] : memref<1x128xf32, #tpu.memory_space<vmem>>, vector<1x128xf32>
    %14 = vector.broadcast %13 : vector<1x128xf32> to vector<128x128xf32>
    %15 = arith.addf %12, %14 : vector<128x128xf32>
    %cst_17 = arith.constant 0.000000e+00 : f32
    %16 = vector.broadcast %cst_17 : f32 to vector<128x128xf32>
    %17 = arith.maximumf %15, %16 : vector<128x128xf32>
    %18 = arith.truncf %10 : vector<128x128xf32> to vector<128x128xbf16>
    %cst_18 = arith.constant dense<0.000000e+00> : vector<128x128xf32>
    %19 = tpu.matmul %18, %3, %cst_18 {dimension_numbers = #tpu.dot_dimension_numbers<[1], [1], [0], [0], [0, 0, 1, 0], [], []>} : vector<128x128xbf16>, vector<128x128xbf16>, vector<128x128xf32> -> vector<128x128xf32>
    %c0_19 = arith.constant 0 : index
    %c0_20 = arith.constant 0 : index
    %20 = vector.load %arg5[%c0_19, %c0_20] : memref<1x128xf32, #tpu.memory_space<vmem>>, vector<1x128xf32>
    %21 = vector.broadcast %20 : vector<1x128xf32> to vector<128x128xf32>
    %22 = arith.addf %19, %21 : vector<128x128xf32>
    %cst_21 = arith.constant dense<0xFF800000> : vector<128xf32>
    %23 = vector.multi_reduction <maximumf>, %22, %cst_21 [1] : vector<128x128xf32> to vector<128xf32>
    %24 = vector.shape_cast %23 : vector<128xf32> to vector<128x1xf32>
    %25 = vector.broadcast %24 : vector<128x1xf32> to vector<128x128xf32>
    %26 = arith.subf %22, %25 : vector<128x128xf32>
    %27 = math.exp %26 : vector<128x128xf32>
    %cst_22 = arith.constant dense<0.000000e+00> : vector<128xf32>
    %28 = vector.multi_reduction <add>, %27, %cst_22 [1] : vector<128x128xf32> to vector<128xf32>
    %29 = vector.shape_cast %28 : vector<128xf32> to vector<128x1xf32>
    %30 = tpu.reciprocal %29 {approx = true} : vector<128x1xf32> -> vector<128x1xf32>
    %31 = vector.broadcast %30 : vector<128x1xf32> to vector<128x128xf32>
    %32 = arith.mulf %27, %31 : vector<128x128xf32>
    %33 = arith.truncf %32 : vector<128x128xf32> to vector<128x128xbf16>
    %cst_23 = arith.constant dense<0.000000e+00> : vector<128x128xf32>
    %34 = tpu.matmul %33, %5, %cst_23 {dimension_numbers = #tpu.dot_dimension_numbers<[1], [0], [0], [1], [0, 0, 1, 1], [], []>} : vector<128x128xbf16>, vector<128x128xbf16>, vector<128x128xf32> -> vector<128x128xf32>
    %35 = arith.truncf %34 : vector<128x128xf32> to vector<128x128xbf16>
    %c0_24 = arith.constant 0 : index
    %c0_25 = arith.constant 0 : index
    %36 = vector.load %arg10[%c0_24, %c0_25] : memref<128x128xbf16, #tpu.memory_space<vmem>>, vector<128x128xbf16>
    %cst_26 = arith.constant dense<0.000000e+00> : vector<128x128xf32>
    %37 = tpu.matmul %35, %36, %cst_26 {dimension_numbers = #tpu.dot_dimension_numbers<[1], [0], [0], [1], [0, 0, 1, 1], [], []>} : vector<128x128xbf16>, vector<128x128xbf16>, vector<128x128xf32> -> vector<128x128xf32>
    %38 = arith.truncf %17 : vector<128x128xf32> to vector<128x128xbf16>
    %c0_27 = arith.constant 0 : index
    %c0_28 = arith.constant 0 : index
    %39 = vector.load %arg11[%c0_27, %c0_28] : memref<128x128xbf16, #tpu.memory_space<vmem>>, vector<128x128xbf16>
    %cst_29 = arith.constant dense<0.000000e+00> : vector<128x128xf32>
    %40 = tpu.matmul %38, %39, %cst_29 {dimension_numbers = #tpu.dot_dimension_numbers<[1], [0], [0], [1], [0, 0, 1, 1], [], []>} : vector<128x128xbf16>, vector<128x128xbf16>, vector<128x128xf32> -> vector<128x128xf32>
    %41 = arith.addf %37, %40 : vector<128x128xf32>
    %c0_30 = arith.constant 0 : index
    %c0_31 = arith.constant 0 : index
    %42 = vector.load %arg12[%c0_30, %c0_31] : memref<1x128xf32, #tpu.memory_space<vmem>>, vector<1x128xf32>
    %43 = vector.broadcast %42 : vector<1x128xf32> to vector<128x128xf32>
    %44 = arith.addf %41, %43 : vector<128x128xf32>
    %cst_32 = arith.constant 0.000000e+00 : f32
    %45 = vector.broadcast %cst_32 : f32 to vector<128x128xf32>
    %46 = arith.maximumf %44, %45 : vector<128x128xf32>
    %47 = arith.truncf %46 : vector<128x128xf32> to vector<128x128xbf16>
    %c0_33 = arith.constant 0 : index
    %c0_34 = arith.constant 0 : index
    %c0_35 = arith.constant 0 : index
    %48 = vector.load %arg13[%c0_33, %c0_34, %c0_35] : memref<1x128x128xbf16, #tpu.memory_space<vmem>>, vector<1x128x128xbf16>
    %49 = vector.shape_cast %48 : vector<1x128x128xbf16> to vector<128x128xbf16>
    %50 = vector.shape_cast %47 : vector<128x128xbf16> to vector<1x128x128xbf16>
    tpu.vector_store %arg13[%c0_33, %c0_34, %c0_35], %50 {strides = array<i32>} : memref<1x128x128xbf16, #tpu.memory_space<vmem>>, vector<1x128x128xbf16>,
    return
  }
  func.func @transform_0(%arg0: i32, %arg1: i32) -> (i32, i32, i32) {
    %c0_i32 = arith.constant 0 : i32
    %c0_i32_0 = arith.constant 0 : i32
    %c0_i32_1 = arith.constant 0 : i32
    return %arg0, %c0_i32, %c0_i32_0 : i32, i32, i32
  }
  func.func @transform_1(%arg0: i32, %arg1: i32) -> (i32, i32, i32) {
    %c0_i32 = arith.constant 0 : i32
    %c0_i32_0 = arith.constant 0 : i32
    %c0_i32_1 = arith.constant 0 : i32
    return %arg0, %c0_i32, %c0_i32_0 : i32, i32, i32
  }
  func.func @transform_2(%arg0: i32, %arg1: i32) -> (i32, i32, i32) {
    %c0_i32 = arith.constant 0 : i32
    %c0_i32_0 = arith.constant 0 : i32
    return %arg0, %arg1, %c0_i32 : i32, i32, i32
  }
  func.func @transform_3(%arg0: i32, %arg1: i32) -> (i32, i32) {
    %c0_i32 = arith.constant 0 : i32
    %c0_i32_0 = arith.constant 0 : i32
    %c0_i32_1 = arith.constant 0 : i32
    return %c0_i32, %c0_i32_0 : i32, i32
  }
  func.func @transform_4(%arg0: i32, %arg1: i32) -> (i32, i32) {
    %c0_i32 = arith.constant 0 : i32
    %c0_i32_0 = arith.constant 0 : i32
    %c0_i32_1 = arith.constant 0 : i32
    return %c0_i32, %c0_i32_0 : i32, i32
  }
  func.func @transform_5(%arg0: i32, %arg1: i32) -> (i32, i32) {
    %c0_i32 = arith.constant 0 : i32
    %c0_i32_0 = arith.constant 0 : i32
    %c0_i32_1 = arith.constant 0 : i32
    return %c0_i32, %c0_i32_0 : i32, i32
  }
  func.func @transform_6(%arg0: i32, %arg1: i32) -> (i32, i32) {
    %c0_i32 = arith.constant 0 : i32
    %c0_i32_0 = arith.constant 0 : i32
    %c0_i32_1 = arith.constant 0 : i32
    return %c0_i32, %c0_i32_0 : i32, i32
  }
  func.func @transform_7(%arg0: i32, %arg1: i32) -> (i32, i32) {
    %c0_i32 = arith.constant 0 : i32
    %c0_i32_0 = arith.constant 0 : i32
    %c0_i32_1 = arith.constant 0 : i32
    return %c0_i32, %c0_i32_0 : i32, i32
  }
  func.func @transform_8(%arg0: i32, %arg1: i32) -> (i32, i32) {
    %c0_i32 = arith.constant 0 : i32
    %c0_i32_0 = arith.constant 0 : i32
    %c0_i32_1 = arith.constant 0 : i32
    return %c0_i32, %c0_i32_0 : i32, i32
  }
  func.func @transform_9(%arg0: i32, %arg1: i32) -> (i32, i32) {
    %c0_i32 = arith.constant 0 : i32
    %c0_i32_0 = arith.constant 0 : i32
    %c0_i32_1 = arith.constant 0 : i32
    return %c0_i32, %c0_i32_0 : i32, i32
  }
  func.func @transform_10(%arg0: i32, %arg1: i32) -> (i32, i32) {
    %c0_i32 = arith.constant 0 : i32
    %c0_i32_0 = arith.constant 0 : i32
    %c0_i32_1 = arith.constant 0 : i32
    return %c0_i32, %c0_i32_0 : i32, i32
  }
  func.func @transform_11(%arg0: i32, %arg1: i32) -> (i32, i32, i32) {
    %c0_i32 = arith.constant 0 : i32
    %c0_i32_0 = arith.constant 0 : i32
    return %arg0, %arg1, %c0_i32 : i32, i32, i32
  }
}

</mosaic_0001>

<llo_original>
// kernel: tpu_custom_call.1
$region0: #{tpu_custom_call.1}
  #allocation0 [shape = 'u32[]', space=smem, size = 0x4, offset = 0x4, fixed_abs, tag = 'smem constant byte address 0x4 - core index']
  #allocation1 [shape = 'u32[144,128]{1,0:T(1,128)}', space=vmem, size = 0x12000, scoped, tag = 'internal scratch']
  %s0 = inlined_call_operand.hbm [shape: bf16[2,128,128], index: 0, kind: input, shape index: {}]
  %s1 = inlined_call_operand.hbm [shape: bf16[2,128,128], index: 1, kind: input, shape index: {}]
  %s2 = inlined_call_operand.hbm [shape: bf16[2,256,128], index: 2, kind: input, shape index: {}]
  %s3 = inlined_call_operand.vmem [shape: f32[1,128], index: 3, kind: input, shape index: {}]
  %s4 = inlined_call_operand.hbm [shape: bf16[128,128], index: 4, kind: input, shape index: {}]
  %s5 = inlined_call_operand.vmem [shape: f32[1,128], index: 5, kind: input, shape index: {}]
  %s6 = inlined_call_operand.hbm [shape: bf16[128,128], index: 6, kind: input, shape index: {}]
  %s7 = inlined_call_operand.vmem [shape: f32[1,128], index: 7, kind: input, shape index: {}]
  %s8 = inlined_call_operand.hbm [shape: bf16[128,128], index: 8, kind: input, shape index: {}]
  %s9 = inlined_call_operand.hbm [shape: bf16[128,128], index: 9, kind: input, shape index: {}]
  %s10 = inlined_call_operand.vmem [shape: f32[1,128], index: 10, kind: input, shape index: {}]
  %s11 = inlined_call_operand.hbm [shape: bf16[2,256,128], index: 11, kind: output, shape index: {}]
  %s12 = sld [smem:[#allocation0]]
  $region105: #{tpu_custom_call.1} parent=0
    _
  %s14 = ssub.s32 1, %s12
  %s15 = scalar_select 0, %s14, %s12
  $region1: #{tpu_custom_call.1} parent=0
    #allocation2 [shape = 'u8[65536]{0}', space=vmem, size = 0x10000, scoped, tag = 'input window, operand 0']
    #allocation3 [shape = 's32[2]{0}', space=sflag, size = 0x8, scoped, tag = 'scoped memory for tpu_custom_call.1']
    #allocation4 [shape = 's32[2]{0}', space=sflag, size = 0x8, scoped, tag = 'scoped memory for tpu_custom_call.1']
    #allocation5 [shape = 'u8[65536]{0}', space=vmem, size = 0x10000, scoped, tag = 'input window, operand 1']
    #allocation6 [shape = 's32[2]{0}', space=sflag, size = 0x8, scoped, tag = 'scoped memory for tpu_custom_call.1']
    #allocation7 [shape = 'u8[65536]{0}', space=vmem, size = 0x10000, scoped, tag = 'input window, operand 2']
    #allocation8 [shape = 'u8[32768]{0}', space=vmem, size = 0x8000, scoped, tag = 'input window, operand 4, single buffered']
    #allocation9 [shape = 's32[1]{0}', space=sflag, size = 0x4, scoped, tag = 'scoped memory for tpu_custom_call.1']
    #allocation10 [shape = 'u8[32768]{0}', space=vmem, size = 0x8000, scoped, tag = 'input window, operand 6, single buffered']
    #allocation11 [shape = 'u8[32768]{0}', space=vmem, size = 0x8000, scoped, tag = 'input window, operand 8, single buffered']
    #allocation12 [shape = 's32[1]{0}', space=sflag, size = 0x4, scoped, tag = 'scoped memory for tpu_custom_call.1']
    #allocation13 [shape = 'u8[32768]{0}', space=vmem, size = 0x8000, scoped, tag = 'input window, operand 9, single buffered']
    #allocation14 [shape = 'u8[65536]{0}', space=vmem, size = 0x10000, scoped, tag = 'output window, operand 0']
    %16 = vsyncpa [#allocation3], 0
    %s17 = scalar_lea.sflag [#allocation3], 1
    %18 = vsyncpa %s17, 0
    %19 = vsyncpa [#allocation6], 0
    %s20 = scalar_lea.sflag [#allocation6], 1
    %21 = vsyncpa %s20, 0
    %22 = vsyncpa [#allocation9], 0
    %23 = vsyncpa [#allocation12], 0
    %24 = vsyncpa [#allocation4], 0
    %s25 = scalar_lea.sflag [#allocation4], 1
    %26 = vsyncpa %s25, 0
    loop: start=0, step=1, limit=6
    $region2: #{tpu_custom_call.1} parent=1 // loop_pre_header
      _
    $region3: #{tpu_custom_call.1} parent=1 // loop_header
      %s28 = sphi 0, %s32
      %p29 = scmp.ge.s32.totalorder %s28, 6
      %s35 = sphi 0, %s47
      %s36 = sphi 0, %s43
      %s37 = sphi 0, %s35
      %s38 = sphi 0, %s36
      %s39 = sphi 0, %s37
      %s40 = sphi 0, %s38
      %s50 = sphi 0, %s52
      %s53 = sphi 0, %s50
      %s54 = sphi 0, %s53
      %s70 = sphi 0, %s54
      %s76 = sphi 0, %s78
      %s79 = sphi 0, %s76
      %s80 = sphi 0, %s79
      %s96 = sphi 0, %s80
      %s104 = sphi 0, %s106
      %s107 = sphi 0, %s104
      %s108 = sphi 0, %s107
      %s124 = sphi 0, %s108
      %s128 = sphi 0, %s128
      %s130 = sphi 0, %s128
      %s131 = sphi 0, %s130
      %s145 = sphi 0, %s131
      %s149 = sphi 0, %s149
      %s151 = sphi 0, %s149
      %s152 = sphi 0, %s151
      %s166 = sphi 0, %s152
      %s170 = sphi 0, %s170
      %s172 = sphi 0, %s170
      %s173 = sphi 0, %s172
      %s187 = sphi 0, %s173
      %s191 = sphi 0, %s191
      %s193 = sphi 0, %s191
      %s194 = sphi 0, %s193
      %s208 = sphi 0, %s194
      %s212 = sphi 0, %s212
      %s214 = sphi 0, %s212
      %s215 = sphi 0, %s214
      %s229 = sphi 0, %s215
      %s233 = sphi 0, %s233
      %s235 = sphi 0, %s233
      %s236 = sphi 0, %s235
      %s250 = sphi 0, %s236
      %s254 = sphi 0, %s254
      %s256 = sphi 0, %s254
      %s257 = sphi 0, %s256
      %s271 = sphi 0, %s257
      %s275 = sphi 0, %s275
      %s277 = sphi 0, %s275
      %s278 = sphi 0, %s277
      %s292 = sphi 0, %s278
      %s300 = sphi 0, %s302
      %s303 = sphi 0, %s300
      %s304 = sphi 0, %s303
      %s320 = sphi 0, %s304
    $region4: #{tpu_custom_call.1} parent=1 // loop_header_branch
      %31 = sbr.rel (%p29) target = $region8
    $region5: #{tpu_custom_call.1} parent=1 // loop_body
      %s33 = ssub.s32 %s28, 1
      %s34 = ssub.s32 %s28, 2
      %s41 = sadd.s32 1, %s36
      %p42 = scmp.ge.s32.totalorder %s41, 2
      %s43 = scalar_select %p42, 0, %s41
      %s44 = sadd.s32 1, %s35
      %s45 = scalar_select %p42, %s44, %s35
      %p46 = scmp.ge.s32.totalorder %s45, 2
      %s47 = scalar_select %p46, 0, %s45
      %s48 = ssub.s32 %s35, %s47
      %p49 = scmp.eq.s32.totalorder %s48, 0
      %s51 = sadd.s32 %s50, 1
      %s52 = scalar_select %p49, %s50, %s51
      %p55 = pneg %p49
      %p56 = scmp.eq.s32.totalorder %s28, 3
      %p57 = por %p55, %p56
      %p58 = scmp.ne.s32.totalorder %s50, %s53
      %p59 = scmp.eq.s32.totalorder %s28, 0
      %p60 = por %p58, %p59
      %p61 = scmp.ne.s32.totalorder %s50, %s53
      %p62 = scmp.eq.s32.totalorder %s33, 3
      %p63 = por %p61, %p62
      %p64 = scmp.ne.s32.totalorder %s53, %s54
      %p65 = scmp.eq.s32.totalorder %s33, 0
      %p66 = por %p64, %p65
      %p67 = scmp.ne.s32.totalorder %s53, %s54
      %p68 = scmp.eq.s32.totalorder %s34, 3
      %p69 = por %p67, %p68
      %p71 = scmp.ne.s32.totalorder %s54, %s70
      %p72 = scmp.eq.s32.totalorder %s34, 0
      %p73 = por %p71, %p72
      %s74 = ssub.s32 %s35, %s47
      %p75 = scmp.eq.s32.totalorder %s74, 0
      %s77 = sadd.s32 %s76, 1
      %s78 = scalar_select %p75, %s76, %s77
      %p81 = pneg %p75
      %p82 = scmp.eq.s32.totalorder %s28, 3
      %p83 = por %p81, %p82
      %p84 = scmp.ne.s32.totalorder %s76, %s79
      %p85 = scmp.eq.s32.totalorder %s28, 0
      %p86 = por %p84, %p85
      %p87 = scmp.ne.s32.totalorder %s76, %s79
      %p88 = scmp.eq.s32.totalorder %s33, 3
      %p89 = por %p87, %p88
      %p90 = scmp.ne.s32.totalorder %s79, %s80
      %p91 = scmp.eq.s32.totalorder %s33, 0
      %p92 = por %p90, %p91
      %p93 = scmp.ne.s32.totalorder %s79, %s80
      %p94 = scmp.eq.s32.totalorder %s34, 3
      %p95 = por %p93, %p94
      %p97 = scmp.ne.s32.totalorder %s80, %s96
      %p98 = scmp.eq.s32.totalorder %s34, 0
      %p99 = por %p97, %p98
      %s100 = ssub.s32 %s35, %s47
      %s101 = ssub.s32 %s36, %s43
      %s102 = sor.u32 %s100, %s101
      %p103 = scmp.eq.s32.totalorder %s102, 0
      %s105 = sadd.s32 %s104, 1
      %s106 = scalar_select %p103, %s104, %s105
      %p109 = pneg %p103
      %p110 = scmp.eq.s32.totalorder %s28, 3
      %p111 = por %p109, %p110
      %p112 = scmp.ne.s32.totalorder %s104, %s107
      %p113 = scmp.eq.s32.totalorder %s28, 0
      %p114 = por %p112, %p113
      %p115 = scmp.ne.s32.totalorder %s104, %s107
      %p116 = scmp.eq.s32.totalorder %s33, 3
      %p117 = por %p115, %p116
      %p118 = scmp.ne.s32.totalorder %s107, %s108
      %p119 = scmp.eq.s32.totalorder %s33, 0
      %p120 = por %p118, %p119
      %p121 = scmp.ne.s32.totalorder %s107, %s108
      %p122 = scmp.eq.s32.totalorder %s34, 3
      %p123 = por %p121, %p122
      %p125 = scmp.ne.s32.totalorder %s108, %s124
      %p126 = scmp.eq.s32.totalorder %s34, 0
      %p127 = por %p125, %p126
      %s129 = sadd.s32 %s128, 1
      %p132 = scmp.eq.s32.totalorder %s28, 3
      %p133 = scmp.ne.s32.totalorder %s128, %s130
      %p134 = scmp.eq.s32.totalorder %s28, 0
      %p135 = por %p133, %p134
      %p136 = scmp.ne.s32.totalorder %s128, %s130
      %p137 = scmp.eq.s32.totalorder %s33, 3
      %p138 = por %p136, %p137
      %p139 = scmp.ne.s32.totalorder %s130, %s131
      %p140 = scmp.eq.s32.totalorder %s33, 0
      %p141 = por %p139, %p140
      %p142 = scmp.ne.s32.totalorder %s130, %s131
      %p143 = scmp.eq.s32.totalorder %s34, 3
      %p144 = por %p142, %p143
      %p146 = scmp.ne.s32.totalorder %s131, %s145
      %p147 = scmp.eq.s32.totalorder %s34, 0
      %p148 = por %p146, %p147
      %s150 = sadd.s32 %s149, 1
      %p153 = scmp.eq.s32.totalorder %s28, 3
      %p154 = scmp.ne.s32.totalorder %s149, %s151
      %p155 = scmp.eq.s32.totalorder %s28, 0
      %p156 = por %p154, %p155
      %p157 = scmp.ne.s32.totalorder %s149, %s151
      %p158 = scmp.eq.s32.totalorder %s33, 3
      %p159 = por %p157, %p158
      %p160 = scmp.ne.s32.totalorder %s151, %s152
      %p161 = scmp.eq.s32.totalorder %s33, 0
      %p162 = por %p160, %p161
      %p163 = scmp.ne.s32.totalorder %s151, %s152
      %p164 = scmp.eq.s32.totalorder %s34, 3
      %p165 = por %p163, %p164
      %p167 = scmp.ne.s32.totalorder %s152, %s166
      %p168 = scmp.eq.s32.totalorder %s34, 0
      %p169 = por %p167, %p168
      %s171 = sadd.s32 %s170, 1
      %p174 = scmp.eq.s32.totalorder %s28, 3
      %p175 = scmp.ne.s32.totalorder %s170, %s172
      %p176 = scmp.eq.s32.totalorder %s28, 0
      %p177 = por %p175, %p176
      %p178 = scmp.ne.s32.totalorder %s170, %s172
      %p179 = scmp.eq.s32.totalorder %s33, 3
      %p180 = por %p178, %p179
      %p181 = scmp.ne.s32.totalorder %s172, %s173
      %p182 = scmp.eq.s32.totalorder %s33, 0
      %p183 = por %p181, %p182
      %p184 = scmp.ne.s32.totalorder %s172, %s173
      %p185 = scmp.eq.s32.totalorder %s34, 3
      %p186 = por %p184, %p185
      %p188 = scmp.ne.s32.totalorder %s173, %s187
      %p189 = scmp.eq.s32.totalorder %s34, 0
      %p190 = por %p188, %p189
      %s192 = sadd.s32 %s191, 1
      %p195 = scmp.eq.s32.totalorder %s28, 3
      %p196 = scmp.ne.s32.totalorder %s191, %s193
      %p197 = scmp.eq.s32.totalorder %s28, 0
      %p198 = por %p196, %p197
      %p199 = scmp.ne.s32.totalorder %s191, %s193
      %p200 = scmp.eq.s32.totalorder %s33, 3
      %p201 = por %p199, %p200
      %p202 = scmp.ne.s32.totalorder %s193, %s194
      %p203 = scmp.eq.s32.totalorder %s33, 0
      %p204 = por %p202, %p203
      %p205 = scmp.ne.s32.totalorder %s193, %s194
      %p206 = scmp.eq.s32.totalorder %s34, 3
      %p207 = por %p205, %p206
      %p209 = scmp.ne.s32.totalorder %s194, %s208
      %p210 = scmp.eq.s32.totalorder %s34, 0
      %p211 = por %p209, %p210
      %s213 = sadd.s32 %s212, 1
      %p216 = scmp.eq.s32.totalorder %s28, 3
      %p217 = scmp.ne.s32.totalorder %s212, %s214
      %p218 = scmp.eq.s32.totalorder %s28, 0
      %p219 = por %p217, %p218
      %p220 = scmp.ne.s32.totalorder %s212, %s214
      %p221 = scmp.eq.s32.totalorder %s33, 3
      %p222 = por %p220, %p221
      %p223 = scmp.ne.s32.totalorder %s214, %s215
      %p224 = scmp.eq.s32.totalorder %s33, 0
      %p225 = por %p223, %p224
      %p226 = scmp.ne.s32.totalorder %s214, %s215
      %p227 = scmp.eq.s32.totalorder %s34, 3
      %p228 = por %p226, %p227
      %p230 = scmp.ne.s32.totalorder %s215, %s229
      %p231 = scmp.eq.s32.totalorder %s34, 0
      %p232 = por %p230, %p231
      %s234 = sadd.s32 %s233, 1
      %p237 = scmp.eq.s32.totalorder %s28, 3
      %p238 = scmp.ne.s32.totalorder %s233, %s235
      %p239 = scmp.eq.s32.totalorder %s28, 0
      %p240 = por %p238, %p239
      %p241 = scmp.ne.s32.totalorder %s233, %s235
      %p242 = scmp.eq.s32.totalorder %s33, 3
      %p243 = por %p241, %p242
      %p244 = scmp.ne.s32.totalorder %s235, %s236
      %p245 = scmp.eq.s32.totalorder %s33, 0
      %p246 = por %p244, %p245
      %p247 = scmp.ne.s32.totalorder %s235, %s236
      %p248 = scmp.eq.s32.totalorder %s34, 3
      %p249 = por %p247, %p248
      %p251 = scmp.ne.s32.totalorder %s236, %s250
      %p252 = scmp.eq.s32.totalorder %s34, 0
      %p253 = por %p251, %p252
      %s255 = sadd.s32 %s254, 1
      %p258 = scmp.eq.s32.totalorder %s28, 3
      %p259 = scmp.ne.s32.totalorder %s254, %s256
      %p260 = scmp.eq.s32.totalorder %s28, 0
      %p261 = por %p259, %p260
      %p262 = scmp.ne.s32.totalorder %s254, %s256
      %p263 = scmp.eq.s32.totalorder %s33, 3
      %p264 = por %p262, %p263
      %p265 = scmp.ne.s32.totalorder %s256, %s257
      %p266 = scmp.eq.s32.totalorder %s33, 0
      %p267 = por %p265, %p266
      %p268 = scmp.ne.s32.totalorder %s256, %s257
      %p269 = scmp.eq.s32.totalorder %s34, 3
      %p270 = por %p268, %p269
      %p272 = scmp.ne.s32.totalorder %s257, %s271
      %p273 = scmp.eq.s32.totalorder %s34, 0
      %p274 = por %p272, %p273
      %s276 = sadd.s32 %s275, 1
      %p279 = scmp.eq.s32.totalorder %s28, 3
      %p280 = scmp.ne.s32.totalorder %s275, %s277
      %p281 = scmp.eq.s32.totalorder %s28, 0
      %p282 = por %p280, %p281
      %p283 = scmp.ne.s32.totalorder %s275, %s277
      %p284 = scmp.eq.s32.totalorder %s33, 3
      %p285 = por %p283, %p284
      %p286 = scmp.ne.s32.totalorder %s277, %s278
      %p287 = scmp.eq.s32.totalorder %s33, 0
      %p288 = por %p286, %p287
      %p289 = scmp.ne.s32.totalorder %s277, %s278
      %p290 = scmp.eq.s32.totalorder %s34, 3
      %p291 = por %p289, %p290
      %p293 = scmp.ne.s32.totalorder %s278, %s292
      %p294 = scmp.eq.s32.totalorder %s34, 0
      %p295 = por %p293, %p294
      %s296 = ssub.s32 %s35, %s47
      %s297 = ssub.s32 %s36, %s43
      %s298 = sor.u32 %s296, %s297
      %p299 = scmp.eq.s32.totalorder %s298, 0
      %s301 = sadd.s32 %s300, 1
      %s302 = scalar_select %p299, %s300, %s301
      %p305 = pneg %p299
      %p306 = scmp.eq.s32.totalorder %s28, 3
      %p307 = por %p305, %p306
      %p308 = scmp.ne.s32.totalorder %s300, %s303
      %p309 = scmp.eq.s32.totalorder %s28, 0
      %p310 = por %p308, %p309
      %p311 = scmp.ne.s32.totalorder %s300, %s303
      %p312 = scmp.eq.s32.totalorder %s33, 3
      %p313 = por %p311, %p312
      %p314 = scmp.ne.s32.totalorder %s303, %s304
      %p315 = scmp.eq.s32.totalorder %s33, 0
      %p316 = por %p314, %p315
      %p317 = scmp.ne.s32.totalorder %s303, %s304
      %p318 = scmp.eq.s32.totalorder %s34, 3
      %p319 = por %p317, %p318
      %p321 = scmp.ne.s32.totalorder %s304, %s320
      %p322 = scmp.eq.s32.totalorder %s34, 0
      %p323 = por %p321, %p322
      %p324 = scmp.le.s32.totalorder 1, %s28
      %p325 = scmp.lt.s32.totalorder %s28, 5
      %p326 = pnand %p324, %p325
      %p327 = pneg %p326
      // Predicated region
      $region9: #{tpu_custom_call.1} parent=5 // pred_check
        _
      $region10: #{tpu_custom_call.1} parent=5 // pred_check_branch
        %329 = sbr.rel (%p326) target = $region12
      $region11: #{tpu_custom_call.1} parent=5 // pred_region
        %s330 = ssub.s32 %s28, 1
        // Predicated region
        $region13: #{tpu_custom_call.1} parent=11 // pred_check
          %p331 = pneg %p141
        $region14: #{tpu_custom_call.1} parent=11 // pred_check_branch
          %333 = sbr.rel (%p331) target = $region16
        $region15: #{tpu_custom_call.1} parent=11 // pred_region
          _
        $region16: #{tpu_custom_call.1} parent=11 // pred_fallthru
          _
        // Predicated region
        $region17: #{tpu_custom_call.1} parent=11 // pred_check
          %p334 = pneg %p162
        $region18: #{tpu_custom_call.1} parent=11 // pred_check_branch
          %336 = sbr.rel (%p334) target = $region20
        $region19: #{tpu_custom_call.1} parent=11 // pred_region
          %s338 = ssub.s32 1024, 1024
          %339 = vsyncadd [#allocation9], %s338
          %s340 = sshll.u32 [#allocation8], 4
          %s341 = int_to_ptr.vmem [resolvable:$true] %s340
          %346 = dma.hbm_to_vmem [thread:$0]  %s4, 1024, %s341, [#allocation9], 64, 64, 4
        $region20: #{tpu_custom_call.1} parent=11 // pred_fallthru
          _
        // Predicated region
        $region21: #{tpu_custom_call.1} parent=11 // pred_check
          %p347 = pneg %p183
        $region22: #{tpu_custom_call.1} parent=11 // pred_check_branch
          %349 = sbr.rel (%p347) target = $region24
        $region23: #{tpu_custom_call.1} parent=11 // pred_region
          _
        $region24: #{tpu_custom_call.1} parent=11 // pred_fallthru
          _
        // Predicated region
        $region25: #{tpu_custom_call.1} parent=11 // pred_check
          %p350 = pneg %p204
        $region26: #{tpu_custom_call.1} parent=11 // pred_check_branch
          %352 = sbr.rel (%p350) target = $region28
        $region27: #{tpu_custom_call.1} parent=11 // pred_region
          %s354 = ssub.s32 1024, 1024
          %355 = vsyncadd [#allocation9], %s354
          %s356 = sshll.u32 [#allocation10], 4
          %s357 = int_to_ptr.vmem [resolvable:$true] %s356
          %362 = dma.hbm_to_vmem [thread:$0]  %s6, 1024, %s357, [#allocation9], 64, 64, 4
        $region28: #{tpu_custom_call.1} parent=11 // pred_fallthru
          _
        // Predicated region
        $region29: #{tpu_custom_call.1} parent=11 // pred_check
          %p363 = pneg %p225
        $region30: #{tpu_custom_call.1} parent=11 // pred_check_branch
          %365 = sbr.rel (%p363) target = $region32
        $region31: #{tpu_custom_call.1} parent=11 // pred_region
          _
        $region32: #{tpu_custom_call.1} parent=11 // pred_fallthru
          _
        // Predicated region
        $region33: #{tpu_custom_call.1} parent=11 // pred_check
          %p366 = pneg %p246
        $region34: #{tpu_custom_call.1} parent=11 // pred_check_branch
          %368 = sbr.rel (%p366) target = $region36
        $region35: #{tpu_custom_call.1} parent=11 // pred_region
          %s370 = ssub.s32 1024, 1024
          %371 = vsyncadd [#allocation12], %s370
          %s372 = sshll.u32 [#allocation11], 4
          %s373 = int_to_ptr.vmem [resolvable:$true] %s372
          %378 = dma.hbm_to_vmem [thread:$0]  %s8, 1024, %s373, [#allocation12], 64, 64, 4
        $region36: #{tpu_custom_call.1} parent=11 // pred_fallthru
          _
        // Predicated region
        $region37: #{tpu_custom_call.1} parent=11 // pred_check
          %p379 = pneg %p267
        $region38: #{tpu_custom_call.1} parent=11 // pred_check_branch
          %381 = sbr.rel (%p379) target = $region40
        $region39: #{tpu_custom_call.1} parent=11 // pred_region
          %s383 = ssub.s32 1024, 1024
          %384 = vsyncadd [#allocation12], %s383
          %s385 = sshll.u32 [#allocation13], 4
          %s386 = int_to_ptr.vmem [resolvable:$true] %s385
          %391 = dma.hbm_to_vmem [thread:$0]  %s9, 1024, %s386, [#allocation12], 64, 64, 4
        $region40: #{tpu_custom_call.1} parent=11 // pred_fallthru
          _
        // Predicated region
        $region41: #{tpu_custom_call.1} parent=11 // pred_check
          %p392 = pneg %p288
        $region42: #{tpu_custom_call.1} parent=11 // pred_check_branch
          %394 = sbr.rel (%p392) target = $region44
        $region43: #{tpu_custom_call.1} parent=11 // pred_region
          _
        $region44: #{tpu_custom_call.1} parent=11 // pred_fallthru
          _
      $region12: #{tpu_custom_call.1} parent=5 // pred_fallthru
        _
      %p395 = scmp.lt.s32.totalorder %s28, 4
      // Predicated region
      $region45: #{tpu_custom_call.1} parent=5 // pred_check
        %p396 = pneg %p395
      $region46: #{tpu_custom_call.1} parent=5 // pred_check_branch
        %398 = sbr.rel (%p396) target = $region48
      $region47: #{tpu_custom_call.1} parent=5 // pred_region
        // Predicated region
        $region49: #{tpu_custom_call.1} parent=47 // pred_check
          %p399 = pneg %p60
        $region50: #{tpu_custom_call.1} parent=47 // pred_check_branch
          %401 = sbr.rel (%p399) target = $region52
        $region51: #{tpu_custom_call.1} parent=47 // pred_region
          %s402 = sand.u32 %s50, 1
          %s403 = scalar_lea.sflag [#allocation3], %s402
          %s404 = sand.u32 %s50, 1
          %s405 = smul.addr %s404, 64
          %s406 = scalar_lea.vmem [#allocation2], %s405
          %s408 = ssub.s32 1024, 1024
          %409 = vsyncadd %s403, %s408
          %s410 = smul.addr %s35, 16
          %s411 = smul.addr %s410, 64
          %s412 = scalar_lea.hbm %s0, %s411
          %s413 = sshll.u32 %s406, 4
          %s414 = int_to_ptr.vmem [resolvable:$true] %s413
          %419 = dma.hbm_to_vmem [thread:$0]  %s412, 1024, %s414, %s403, 64, 64, 4
        $region52: #{tpu_custom_call.1} parent=47 // pred_fallthru
          _
        // Predicated region
        $region53: #{tpu_custom_call.1} parent=47 // pred_check
          %p420 = pneg %p86
        $region54: #{tpu_custom_call.1} parent=47 // pred_check_branch
          %422 = sbr.rel (%p420) target = $region56
        $region55: #{tpu_custom_call.1} parent=47 // pred_region
          %s423 = sand.u32 %s28, 1
          %s424 = scalar_lea.sflag [#allocation6], %s423
          %s425 = sand.u32 %s76, 1
          %s426 = smul.addr %s425, 64
          %s427 = scalar_lea.vmem [#allocation5], %s426
          %s429 = ssub.s32 1024, 1024
          %430 = vsyncadd %s424, %s429
          %s431 = smul.addr %s35, 16
          %s432 = smul.addr %s431, 64
          %s433 = scalar_lea.hbm %s1, %s432
          %s434 = sshll.u32 %s427, 4
          %s435 = int_to_ptr.vmem [resolvable:$true] %s434
          %440 = dma.hbm_to_vmem [thread:$0]  %s433, 1024, %s435, %s424, 64, 64, 4
        $region56: #{tpu_custom_call.1} parent=47 // pred_fallthru
          _
        // Predicated region
        $region57: #{tpu_custom_call.1} parent=47 // pred_check
          %p441 = pneg %p114
        $region58: #{tpu_custom_call.1} parent=47 // pred_check_branch
          %443 = sbr.rel (%p441) target = $region60
        $region59: #{tpu_custom_call.1} parent=47 // pred_region
          %s444 = sand.u32 %s28, 1
          %s445 = scalar_lea.sflag [#allocation6], %s444
          %s446 = sand.u32 %s104, 1
          %s447 = smul.addr %s446, 64
          %s448 = scalar_lea.vmem [#allocation7], %s447
          %s449 = smul.u32 16, %s36
          %s451 = ssub.s32 1024, 1024
          %452 = vsyncadd %s445, %s451
          %s453 = smul.addr %s35, 32
          %s454 = sadd.s32 %s449, %s453
          %s455 = smul.addr %s454, 64
          %s456 = scalar_lea.hbm %s2, %s455
          %s457 = sshll.u32 %s448, 4
          %s458 = int_to_ptr.vmem [resolvable:$true] %s457
          %463 = dma.hbm_to_vmem [thread:$0]  %s456, 1024, %s458, %s445, 64, 64, 4
        $region60: #{tpu_custom_call.1} parent=47 // pred_fallthru
          _
      $region48: #{tpu_custom_call.1} parent=5 // pred_fallthru
        _
      %p464 = scmp.le.s32.totalorder 1, %s28
      %p465 = scmp.lt.s32.totalorder %s28, 5
      %p466 = pnand %p464, %p465
      %p467 = pneg %p466
      // Predicated region
      $region61: #{tpu_custom_call.1} parent=5 // pred_check
        _
      $region62: #{tpu_custom_call.1} parent=5 // pred_check_branch
        %469 = sbr.rel (%p466) target = $region64
      $region63: #{tpu_custom_call.1} parent=5 // pred_region
        %s470 = ssub.s32 %s28, 1
        %s471 = sand.u32 %s53, 1
        %s472 = scalar_lea.sflag [#allocation3], %s471
        %s473 = sand.u32 %s53, 1
        %s474 = smul.addr %s473, 64
        %s475 = scalar_lea.vmem [#allocation2], %s474
        // Predicated region
        $region65: #{tpu_custom_call.1} parent=63 // pred_check
          %p476 = pneg %p66
        $region66: #{tpu_custom_call.1} parent=63 // pred_check_branch
          %478 = sbr.rel (%p476) target = $region68
        $region67: #{tpu_custom_call.1} parent=63 // pred_region
          %479 = dma.done %s472, 1024
        $region68: #{tpu_custom_call.1} parent=63 // pred_fallthru
          _
        %s480 = sand.u32 %s33, 1
        %s481 = scalar_lea.sflag [#allocation6], %s480
        %s482 = sand.u32 %s79, 1
        %s483 = smul.addr %s482, 64
        %s484 = scalar_lea.vmem [#allocation5], %s483
        // Predicated region
        $region69: #{tpu_custom_call.1} parent=63 // pred_check
          %p485 = pneg %p92
        $region70: #{tpu_custom_call.1} parent=63 // pred_check_branch
          %487 = sbr.rel (%p485) target = $region72
        $region71: #{tpu_custom_call.1} parent=63 // pred_region
          %488 = dma.done %s481, 1024
        $region72: #{tpu_custom_call.1} parent=63 // pred_fallthru
          _
        %s489 = sand.u32 %s33, 1
        %s490 = scalar_lea.sflag [#allocation6], %s489
        %s491 = sand.u32 %s107, 1
        %s492 = smul.addr %s491, 64
        %s493 = scalar_lea.vmem [#allocation7], %s492
        // Predicated region
        $region73: #{tpu_custom_call.1} parent=63 // pred_check
          %p494 = pneg %p120
        $region74: #{tpu_custom_call.1} parent=63 // pred_check_branch
          %496 = sbr.rel (%p494) target = $region76
        $region75: #{tpu_custom_call.1} parent=63 // pred_region
          %497 = dma.done %s490, 1024
        $region76: #{tpu_custom_call.1} parent=63 // pred_fallthru
          _
        // Predicated region
        $region77: #{tpu_custom_call.1} parent=63 // pred_check
          %p498 = pneg %p162
        $region78: #{tpu_custom_call.1} parent=63 // pred_check_branch
          %500 = sbr.rel (%p498) target = $region80
        $region79: #{tpu_custom_call.1} parent=63 // pred_region
          %501 = dma.done [#allocation9], 1024
        $region80: #{tpu_custom_call.1} parent=63 // pred_fallthru
          _
        // Predicated region
        $region81: #{tpu_custom_call.1} parent=63 // pred_check
          %p502 = pneg %p204
        $region82: #{tpu_custom_call.1} parent=63 // pred_check_branch
          %504 = sbr.rel (%p502) target = $region84
        $region83: #{tpu_custom_call.1} parent=63 // pred_region
          %505 = dma.done [#allocation9], 1024
        $region84: #{tpu_custom_call.1} parent=63 // pred_fallthru
          _
        // Predicated region
        $region85: #{tpu_custom_call.1} parent=63 // pred_check
          %p506 = pneg %p246
        $region86: #{tpu_custom_call.1} parent=63 // pred_check_branch
          %508 = sbr.rel (%p506) target = $region88
        $region87: #{tpu_custom_call.1} parent=63 // pred_region
          %509 = dma.done [#allocation12], 1024
        $region88: #{tpu_custom_call.1} parent=63 // pred_fallthru
          _
        // Predicated region
        $region89: #{tpu_custom_call.1} parent=63 // pred_check
          %p510 = pneg %p267
        $region90: #{tpu_custom_call.1} parent=63 // pred_check_branch
          %512 = sbr.rel (%p510) target = $region92
        $region91: #{tpu_custom_call.1} parent=63 // pred_region
          %513 = dma.done [#allocation12], 1024
        $region92: #{tpu_custom_call.1} parent=63 // pred_fallthru
          _
        %s514 = sand.u32 %s53, 1
        %s515 = scalar_lea.sflag [#allocation3], %s514
        %s516 = sand.u32 %s53, 1
        %s517 = smul.addr %s516, 64
        %s518 = scalar_lea.vmem [#allocation2], %s517
        %p519 = pneg %p66
        %p520 = pneg %p63
        %s521 = sand.u32 %s33, 1
        %s522 = scalar_lea.sflag [#allocation6], %s521
        %s523 = sand.u32 %s79, 1
        %s524 = smul.addr %s523, 64
        %s525 = scalar_lea.vmem [#allocation5], %s524
        %p526 = pneg %p92
        %p527 = pneg %p89
        %s528 = sand.u32 %s33, 1
        %s529 = scalar_lea.sflag [#allocation6], %s528
        %s530 = sand.u32 %s107, 1
        %s531 = smul.addr %s530, 64
        %s532 = scalar_lea.vmem [#allocation7], %s531
        %p533 = pneg %p120
        %p534 = pneg %p117
        %p535 = pneg %p141
        %p536 = pneg %p138
        %p537 = pneg %p162
        %p538 = pneg %p159
        %p539 = pneg %p183
        %p540 = pneg %p180
        %p541 = pneg %p204
        %p542 = pneg %p201
        %p543 = pneg %p225
        %p544 = pneg %p222
        %p545 = pneg %p246
        %p546 = pneg %p243
        %p547 = pneg %p267
        %p548 = pneg %p264
        %p549 = pneg %p288
        %p550 = pneg %p285
        %p551 = pneg %p316
        %p552 = pneg %p313
        %s553 = sand.u32 %s303, 1
        %s554 = scalar_lea.sflag [#allocation4], %s553
        %s555 = sand.u32 %s303, 1
        %s556 = smul.addr %s555, 64
        %s557 = scalar_lea.vmem [#allocation14], %s556
        %s558 = smul.u32 16, %s38
        %s559 = smul.u32 16, %s38
        %v561 = vld [vmem:[%s493] sm:$0xf]
        %v562 = vld [vmem:[%s493 + $0x4] sm:$0xf]
        %v563 = vld [vmem:[%s493 + $0x8] sm:$0xf]
        %v564 = vld [vmem:[%s493 + $0xc] sm:$0xf]
        %v565 = vld [vmem:[%s493 + $0x10] sm:$0xf]
        %v566 = vld [vmem:[%s493 + $0x14] sm:$0xf]
        %v567 = vld [vmem:[%s493 + $0x18] sm:$0xf]
        %v568 = vld [vmem:[%s493 + $0x1c] sm:$0xf]
        %v569 = vld [vmem:[%s493 + $0x20] sm:$0xf]
        %v570 = vld [vmem:[%s493 + $0x24] sm:$0xf]
        %v571 = vld [vmem:[%s493 + $0x28] sm:$0xf]
        %v572 = vld [vmem:[%s493 + $0x2c] sm:$0xf]
        %v573 = vld [vmem:[%s493 + $0x30] sm:$0xf]
        %v574 = vld [vmem:[%s493 + $0x34] sm:$0xf]
        %v575 = vld [vmem:[%s493 + $0x38] sm:$0xf]
        %v576 = vld [vmem:[%s493 + $0x3c] sm:$0xf]
        %v577 = vld [vmem:[%s475] sm:$0xf]
        %v578 = vld [vmem:[%s475 + $0x4] sm:$0xf]
        %v579 = vld [vmem:[%s475 + $0x8] sm:$0xf]
        %v580 = vld [vmem:[%s475 + $0xc] sm:$0xf]
        %v581 = vld [vmem:[%s475 + $0x10] sm:$0xf]
        %v582 = vld [vmem:[%s475 + $0x14] sm:$0xf]
        %v583 = vld [vmem:[%s475 + $0x18] sm:$0xf]
        %v584 = vld [vmem:[%s475 + $0x1c] sm:$0xf]
        %v585 = vld [vmem:[%s475 + $0x20] sm:$0xf]
        %v586 = vld [vmem:[%s475 + $0x24] sm:$0xf]
        %v587 = vld [vmem:[%s475 + $0x28] sm:$0xf]
        %v588 = vld [vmem:[%s475 + $0x2c] sm:$0xf]
        %v589 = vld [vmem:[%s475 + $0x30] sm:$0xf]
        %v590 = vld [vmem:[%s475 + $0x34] sm:$0xf]
        %v591 = vld [vmem:[%s475 + $0x38] sm:$0xf]
        %v592 = vld [vmem:[%s475 + $0x3c] sm:$0xf]
        %v593 = vld [vmem:[%s484] sm:$0xf]
        %v594 = vld [vmem:[%s484 + $0x4] sm:$0xf]
        %v595 = vld [vmem:[%s484 + $0x8] sm:$0xf]
        %v596 = vld [vmem:[%s484 + $0xc] sm:$0xf]
        %v597 = vld [vmem:[%s484 + $0x10] sm:$0xf]
        %v598 = vld [vmem:[%s484 + $0x14] sm:$0xf]
        %v599 = vld [vmem:[%s484 + $0x18] sm:$0xf]
        %v600 = vld [vmem:[%s484 + $0x1c] sm:$0xf]
        %v601 = vld [vmem:[%s484 + $0x20] sm:$0xf]
        %v602 = vld [vmem:[%s484 + $0x24] sm:$0xf]
        %v603 = vld [vmem:[%s484 + $0x28] sm:$0xf]
        %v604 = vld [vmem:[%s484 + $0x2c] sm:$0xf]
        %v605 = vld [vmem:[%s484 + $0x30] sm:$0xf]
        %v606 = vld [vmem:[%s484 + $0x34] sm:$0xf]
        %v607 = vld [vmem:[%s484 + $0x38] sm:$0xf]
        %v608 = vld [vmem:[%s484 + $0x3c] sm:$0xf]
        %v609 = vld [vmem:[#allocation8] sm:$0xf]
        %v610 = vld [vmem:[#allocation8 + $0x4] sm:$0xf]
        %v611 = vld [vmem:[#allocation8 + $0x8] sm:$0xf]
        %v612 = vld [vmem:[#allocation8 + $0xc] sm:$0xf]
        %v613 = vld [vmem:[#allocation8 + $0x10] sm:$0xf]
        %v614 = vld [vmem:[#allocation8 + $0x14] sm:$0xf]
        %v615 = vld [vmem:[#allocation8 + $0x18] sm:$0xf]
        %v616 = vld [vmem:[#allocation8 + $0x1c] sm:$0xf]
        %v617 = vld [vmem:[#allocation8 + $0x20] sm:$0xf]
        %v618 = vld [vmem:[#allocation8 + $0x24] sm:$0xf]
        %v619 = vld [vmem:[#allocation8 + $0x28] sm:$0xf]
        %v620 = vld [vmem:[#allocation8 + $0x2c] sm:$0xf]
        %v621 = vld [vmem:[#allocation8 + $0x30] sm:$0xf]
        %v622 = vld [vmem:[#allocation8 + $0x34] sm:$0xf]
        %v623 = vld [vmem:[#allocation8 + $0x38] sm:$0xf]
        %v624 = vld [vmem:[#allocation8 + $0x3c] sm:$0xf]
        %v625 = vld [vmem:[%s5] sm:$0x1]
        %v627 = vlaneseq
        %v628 = vshrl.u32 %v627, 7
        %v629 = vsub.s32 0, %v628
        %v630 = vrot.slane %v625, %v629
        %v648 = vunpack.c.l.b16 %v561
        %v649 = vunpack.c.l.b16 %v562
        %v650 = vunpack.c.l.b16 %v563
        %v651 = vunpack.c.l.b16 %v564
        %v652 = vunpack.c.l.b16 %v565
        %v653 = vunpack.c.l.b16 %v566
        %v654 = vunpack.c.l.b16 %v567
        %v655 = vunpack.c.l.b16 %v568
        %v656 = vunpack.c.l.b16 %v569
        %v657 = vunpack.c.l.b16 %v570
        %v658 = vunpack.c.l.b16 %v571
        %v659 = vunpack.c.l.b16 %v572
        %v660 = vunpack.c.l.b16 %v573
        %v661 = vunpack.c.l.b16 %v574
        %v662 = vunpack.c.l.b16 %v575
        %v663 = vunpack.c.l.b16 %v576
        %v664 = vpack.c.b16 %v649, %v648
        %v665 = vpack.c.b16 %v651, %v650
        %v666 = vpack.c.b16 %v653, %v652
        %v667 = vpack.c.b16 %v655, %v654
        %v668 = vpack.c.b16 %v657, %v656
        %v669 = vpack.c.b16 %v659, %v658
        %v670 = vpack.c.b16 %v661, %v660
        %v671 = vpack.c.b16 %v663, %v662
        %v696 = vunpack.c.l.b16 %v609
        %v697 = vunpack.c.l.b16 %v610
        %v698 = vunpack.c.l.b16 %v611
        %v699 = vunpack.c.l.b16 %v612
        %v700 = vunpack.c.l.b16 %v613
        %v701 = vunpack.c.l.b16 %v614
        %v702 = vunpack.c.l.b16 %v615
        %v703 = vunpack.c.l.b16 %v616
        %v704 = vunpack.c.l.b16 %v617
        %v705 = vunpack.c.l.b16 %v618
        %v706 = vunpack.c.l.b16 %v619
        %v707 = vunpack.c.l.b16 %v620
        %v708 = vunpack.c.l.b16 %v621
        %v709 = vunpack.c.l.b16 %v622
        %v710 = vunpack.c.l.b16 %v623
        %v711 = vunpack.c.l.b16 %v624
        %v712 = vpack.c.b16 %v697, %v696
        %v713 = vpack.c.b16 %v699, %v698
        %v714 = vpack.c.b16 %v701, %v700
        %v715 = vpack.c.b16 %v703, %v702
        %v716 = vpack.c.b16 %v705, %v704
        %v717 = vpack.c.b16 %v707, %v706
        %v718 = vpack.c.b16 %v709, %v708
        %v719 = vpack.c.b16 %v711, %v710
        %728 = vmatprep.subr.bf16.mxu0 0
        %729 = vmatpush1.bf16.msra.mxu0 %v719
        %730 = vmatprep.subr.bf16.mxu0 0
        %731 = vmatpush1.bf16.msra.mxu0 %v718
        %732 = vmatprep.subr.bf16.mxu0 0
        %733 = vmatpush1.bf16.msra.mxu0 %v717
        %734 = vmatprep.subr.bf16.mxu0 0
        %735 = vmatpush1.bf16.msra.mxu0 %v716
        %736 = vmatprep.subr.bf16.mxu0 0
        %737 = vmatpush1.bf16.msra.mxu0 %v715
        %738 = vmatprep.subr.bf16.mxu0 0
        %739 = vmatpush1.bf16.msra.mxu0 %v714
        %740 = vmatprep.subr.bf16.mxu0 0
        %741 = vmatpush1.bf16.msra.mxu0 %v713
        %742 = vmatprep.subr.bf16.mxu0 0
        %743 = vmatpush1.bf16.msra.mxu0 %v712
        %744 = vmatprep.subr.bf16.mxu0 0
        %745 = vmatpush2.bf16.msra.mxu0 0
        %746 = vmatprep.subr.bf16.mxu0 0
        %747 = vmatpush2.bf16.msra.mxu0 0
        %748 = vmatprep.subr.bf16.mxu0 0
        %749 = vmatpush2.bf16.msra.mxu0 0
        %750 = vmatprep.subr.bf16.mxu0 0
        %751 = vmatpush2.bf16.msra.mxu0 0
        %752 = vmatprep.subr.bf16.mxu0 0
        %753 = vmatpush2.bf16.msra.mxu0 0
        %754 = vmatprep.subr.bf16.mxu0 0
        %755 = vmatpush2.bf16.msra.mxu0 0
        %756 = vmatprep.subr.bf16.mxu0 0
        %757 = vmatpush2.bf16.msra.mxu0 0
        %758 = vmatprep.subr.bf16.mxu0 0
        %759 = vmatpush2.bf16.msra.mxu0 0
        %760 = vmatprep.mubr.bf16.mxu0 0
        %761 = vmatmul.mubr.bf16.gmra.mxu0 %v664
        %v762 = vpop.f32.mrf.mxu0
        %v763 = vadd.f32 %v630, %v762
        %v764 = vpop.f32.mrf.mxu0
        %v765 = vpop.f32.mrf.mxu0
        %v766 = vadd.f32 %v630, %v765
        %v767 = vpop.f32.mrf.mxu0
        %768 = vmatprep.mubr.bf16.mxu0 0
        %769 = vmatmul.mubr.bf16.gmra.mxu0 %v665
        %v770 = vpop.f32.mrf.mxu0
        %v771 = vadd.f32 %v630, %v770
        %v772 = vpop.f32.mrf.mxu0
        %v773 = vpop.f32.mrf.mxu0
        %v774 = vadd.f32 %v630, %v773
        %v775 = vpop.f32.mrf.mxu0
        %776 = vmatprep.mubr.bf16.mxu0 0
        %777 = vmatmul.mubr.bf16.gmra.mxu0 %v666
        %v778 = vpop.f32.mrf.mxu0
        %v779 = vadd.f32 %v630, %v778
        %v780 = vpop.f32.mrf.mxu0
        %v781 = vpop.f32.mrf.mxu0
        %v782 = vadd.f32 %v630, %v781
        %v783 = vpop.f32.mrf.mxu0
        %784 = vmatprep.mubr.bf16.mxu0 0
        %785 = vmatmul.mubr.bf16.gmra.mxu0 %v667
        %v786 = vpop.f32.mrf.mxu0
        %v787 = vadd.f32 %v630, %v786
        %v788 = vpop.f32.mrf.mxu0
        %v789 = vpop.f32.mrf.mxu0
        %v790 = vadd.f32 %v630, %v789
        %v791 = vpop.f32.mrf.mxu0
        %792 = vmatprep.mubr.bf16.mxu0 0
        %793 = vmatmul.mubr.bf16.gmra.mxu0 %v668
        %v794 = vpop.f32.mrf.mxu0
        %v795 = vadd.f32 %v630, %v794
        %v796 = vpop.f32.mrf.mxu0
        %v797 = vpop.f32.mrf.mxu0
        %v798 = vadd.f32 %v630, %v797
        %v799 = vpop.f32.mrf.mxu0
        %800 = vmatprep.mubr.bf16.mxu0 0
        %801 = vmatmul.mubr.bf16.gmra.mxu0 %v669
        %v802 = vpop.f32.mrf.mxu0
        %v803 = vadd.f32 %v630, %v802
        %v804 = vpop.f32.mrf.mxu0
        %v805 = vpop.f32.mrf.mxu0
        %v806 = vadd.f32 %v630, %v805
        %v807 = vpop.f32.mrf.mxu0
        %808 = vmatprep.mubr.bf16.mxu0 0
        %809 = vmatmul.mubr.bf16.gmra.mxu0 %v670
        %v810 = vpop.f32.mrf.mxu0
        %v811 = vadd.f32 %v630, %v810
        %v812 = vpop.f32.mrf.mxu0
        %v813 = vpop.f32.mrf.mxu0
        %v814 = vadd.f32 %v630, %v813
        %v815 = vpop.f32.mrf.mxu0
        %816 = vmatprep.mubr.bf16.mxu0 0
        %817 = vmatmul.mubr.bf16.gmra.mxu0 %v671
        %v818 = vpop.f32.mrf.mxu0
        %v819 = vadd.f32 %v630, %v818
        %v820 = vpop.f32.mrf.mxu0
        %v821 = vpop.f32.mrf.mxu0
        %v822 = vadd.f32 %v630, %v821
        %v823 = vpop.f32.mrf.mxu0
        %824 = vdwg.mxu0
        %v825 = vld [vmem:[#allocation10] sm:$0xf]
        %v826 = vld [vmem:[#allocation10 + $0x4] sm:$0xf]
        %v827 = vld [vmem:[#allocation10 + $0x8] sm:$0xf]
        %v828 = vld [vmem:[#allocation10 + $0xc] sm:$0xf]
        %v829 = vld [vmem:[#allocation10 + $0x10] sm:$0xf]
        %v830 = vld [vmem:[#allocation10 + $0x14] sm:$0xf]
        %v831 = vld [vmem:[#allocation10 + $0x18] sm:$0xf]
        %v832 = vld [vmem:[#allocation10 + $0x1c] sm:$0xf]
        %v833 = vld [vmem:[#allocation10 + $0x20] sm:$0xf]
        %v834 = vld [vmem:[#allocation10 + $0x24] sm:$0xf]
        %v835 = vld [vmem:[#allocation10 + $0x28] sm:$0xf]
        %v836 = vld [vmem:[#allocation10 + $0x2c] sm:$0xf]
        %v837 = vld [vmem:[#allocation10 + $0x30] sm:$0xf]
        %v838 = vld [vmem:[#allocation10 + $0x34] sm:$0xf]
        %v839 = vld [vmem:[#allocation10 + $0x38] sm:$0xf]
        %v840 = vld [vmem:[#allocation10 + $0x3c] sm:$0xf]
        %v841 = vld [vmem:[%s7] sm:$0x1]
        %v843 = vlaneseq
        %v844 = vshrl.u32 %v843, 7
        %v845 = vsub.s32 0, %v844
        %v846 = vrot.slane %v841, %v845
        %v864 = vunpack.c.l.b16 %v825
        %v865 = vunpack.c.l.b16 %v826
        %v866 = vunpack.c.l.b16 %v827
        %v867 = vunpack.c.l.b16 %v828
        %v868 = vunpack.c.l.b16 %v829
        %v869 = vunpack.c.l.b16 %v830
        %v870 = vunpack.c.l.b16 %v831
        %v871 = vunpack.c.l.b16 %v832
        %v872 = vunpack.c.l.b16 %v833
        %v873 = vunpack.c.l.b16 %v834
        %v874 = vunpack.c.l.b16 %v835
        %v875 = vunpack.c.l.b16 %v836
        %v876 = vunpack.c.l.b16 %v837
        %v877 = vunpack.c.l.b16 %v838
        %v878 = vunpack.c.l.b16 %v839
        %v879 = vunpack.c.l.b16 %v840
        %v880 = vpack.c.b16 %v865, %v864
        %v881 = vpack.c.b16 %v867, %v866
        %v882 = vpack.c.b16 %v869, %v868
        %v883 = vpack.c.b16 %v871, %v870
        %v884 = vpack.c.b16 %v873, %v872
        %v885 = vpack.c.b16 %v875, %v874
        %v886 = vpack.c.b16 %v877, %v876
        %v887 = vpack.c.b16 %v879, %v878
        %896 = vmatprep.subr.bf16.mxu0 0
        %897 = vmatpush1.bf16.msra.mxu0 %v887
        %898 = vmatprep.subr.bf16.mxu0 0
        %899 = vmatpush1.bf16.msra.mxu0 %v886
        %900 = vmatprep.subr.bf16.mxu0 0
        %901 = vmatpush1.bf16.msra.mxu0 %v885
        %902 = vmatprep.subr.bf16.mxu0 0
        %903 = vmatpush1.bf16.msra.mxu0 %v884
        %904 = vmatprep.subr.bf16.mxu0 0
        %905 = vmatpush1.bf16.msra.mxu0 %v883
        %906 = vmatprep.subr.bf16.mxu0 0
        %907 = vmatpush1.bf16.msra.mxu0 %v882
        %908 = vmatprep.subr.bf16.mxu0 0
        %909 = vmatpush1.bf16.msra.mxu0 %v881
        %910 = vmatprep.subr.bf16.mxu0 0
        %911 = vmatpush1.bf16.msra.mxu0 %v880
        %912 = vmatprep.subr.bf16.mxu0 0
        %913 = vmatpush2.bf16.msra.mxu0 0
        %914 = vmatprep.subr.bf16.mxu0 0
        %915 = vmatpush2.bf16.msra.mxu0 0
        %916 = vmatprep.subr.bf16.mxu0 0
        %917 = vmatpush2.bf16.msra.mxu0 0
        %918 = vmatprep.subr.bf16.mxu0 0
        %919 = vmatpush2.bf16.msra.mxu0 0
        %920 = vmatprep.subr.bf16.mxu0 0
        %921 = vmatpush2.bf16.msra.mxu0 0
        %922 = vmatprep.subr.bf16.mxu0 0
        %923 = vmatpush2.bf16.msra.mxu0 0
        %924 = vmatprep.subr.bf16.mxu0 0
        %925 = vmatpush2.bf16.msra.mxu0 0
        %926 = vmatprep.subr.bf16.mxu0 0
        %927 = vmatpush2.bf16.msra.mxu0 0
        %928 = vmatprep.mubr.bf16.mxu0 0
        %929 = vmatmul.mubr.bf16.gmra.mxu0 %v664
        %v930 = vpop.f32.mrf.mxu0
        %v931 = vadd.f32 %v846, %v930
        %v932 = vpop.f32.mrf.mxu0
        %v933 = vpop.f32.mrf.mxu0
        %v934 = vadd.f32 %v846, %v933
        %v935 = vpop.f32.mrf.mxu0
        %936 = vmatprep.mubr.bf16.mxu0 0
        %937 = vmatmul.mubr.bf16.gmra.mxu0 %v665
        %v938 = vpop.f32.mrf.mxu0
        %v939 = vadd.f32 %v846, %v938
        %v940 = vpop.f32.mrf.mxu0
        %v941 = vpop.f32.mrf.mxu0
        %v942 = vadd.f32 %v846, %v941
        %v943 = vpop.f32.mrf.mxu0
        %944 = vmatprep.mubr.bf16.mxu0 0
        %945 = vmatmul.mubr.bf16.gmra.mxu0 %v666
        %v946 = vpop.f32.mrf.mxu0
        %v947 = vadd.f32 %v846, %v946
        %v948 = vpop.f32.mrf.mxu0
        %v949 = vpop.f32.mrf.mxu0
        %v950 = vadd.f32 %v846, %v949
        %v951 = vpop.f32.mrf.mxu0
        %952 = vmatprep.mubr.bf16.mxu0 0
        %953 = vmatmul.mubr.bf16.gmra.mxu0 %v667
        %v954 = vpop.f32.mrf.mxu0
        %v955 = vadd.f32 %v846, %v954
        %v956 = vpop.f32.mrf.mxu0
        %v957 = vpop.f32.mrf.mxu0
        %v958 = vadd.f32 %v846, %v957
        %v959 = vpop.f32.mrf.mxu0
        %960 = vmatprep.mubr.bf16.mxu0 0
        %961 = vmatmul.mubr.bf16.gmra.mxu0 %v668
        %v962 = vpop.f32.mrf.mxu0
        %v963 = vadd.f32 %v846, %v962
        %v964 = vpop.f32.mrf.mxu0
        %v965 = vpop.f32.mrf.mxu0
        %v966 = vadd.f32 %v846, %v965
        %v967 = vpop.f32.mrf.mxu0
        %968 = vmatprep.mubr.bf16.mxu0 0
        %969 = vmatmul.mubr.bf16.gmra.mxu0 %v669
        %v970 = vpop.f32.mrf.mxu0
        %v971 = vadd.f32 %v846, %v970
        %v972 = vpop.f32.mrf.mxu0
        %v973 = vpop.f32.mrf.mxu0
        %v974 = vadd.f32 %v846, %v973
        %v975 = vpop.f32.mrf.mxu0
        %976 = vmatprep.mubr.bf16.mxu0 0
        %977 = vmatmul.mubr.bf16.gmra.mxu0 %v670
        %v978 = vpop.f32.mrf.mxu0
        %v979 = vadd.f32 %v846, %v978
        %v980 = vpop.f32.mrf.mxu0
        %v981 = vpop.f32.mrf.mxu0
        %v982 = vadd.f32 %v846, %v981
        %v983 = vpop.f32.mrf.mxu0
        %984 = vmatprep.mubr.bf16.mxu0 0
        %985 = vmatmul.mubr.bf16.gmra.mxu0 %v671
        %v986 = vpop.f32.mrf.mxu0
        %v987 = vadd.f32 %v846, %v986
        %v988 = vpop.f32.mrf.mxu0
        %v989 = vpop.f32.mrf.mxu0
        %v990 = vadd.f32 %v846, %v989
        %v991 = vpop.f32.mrf.mxu0
        %992 = vdwg.mxu0
        %v993 = vmax.f32 %v931, 0.0
        %v994 = vmax.f32 %v934, 0.0
        %v995 = vmax.f32 %v939, 0.0
        %v996 = vmax.f32 %v942, 0.0
        %v997 = vmax.f32 %v947, 0.0
        %v998 = vmax.f32 %v950, 0.0
        %v999 = vmax.f32 %v955, 0.0
        %v1000 = vmax.f32 %v958, 0.0
        %v1001 = vmax.f32 %v963, 0.0
        %v1002 = vmax.f32 %v966, 0.0
        %v1003 = vmax.f32 %v971, 0.0
        %v1004 = vmax.f32 %v974, 0.0
        %v1005 = vmax.f32 %v979, 0.0
        %v1006 = vmax.f32 %v982, 0.0
        %v1007 = vmax.f32 %v987, 0.0
        %v1008 = vmax.f32 %v990, 0.0
        %v1009 = vpack.c.bf16 %v766, %v763
        %v1010 = vpack.c.bf16 %v774, %v771
        %v1011 = vpack.c.bf16 %v782, %v779
        %v1012 = vpack.c.bf16 %v790, %v787
        %v1013 = vpack.c.bf16 %v798, %v795
        %v1014 = vpack.c.bf16 %v806, %v803
        %v1015 = vpack.c.bf16 %v814, %v811
        %v1016 = vpack.c.bf16 %v822, %v819
        %v1017 = vld [vmem:[%s3] sm:$0x1]
        %v1019 = vlaneseq
        %v1020 = vshrl.u32 %v1019, 7
        %v1021 = vsub.s32 0, %v1020
        %v1022 = vrot.slane %v1017, %v1021
        %v1040 = vunpack.c.l.b16 %v577
        %v1041 = vunpack.c.l.b16 %v578
        %v1042 = vunpack.c.l.b16 %v579
        %v1043 = vunpack.c.l.b16 %v580
        %v1044 = vunpack.c.l.b16 %v581
        %v1045 = vunpack.c.l.b16 %v582
        %v1046 = vunpack.c.l.b16 %v583
        %v1047 = vunpack.c.l.b16 %v584
        %v1048 = vunpack.c.l.b16 %v585
        %v1049 = vunpack.c.l.b16 %v586
        %v1050 = vunpack.c.l.b16 %v587
        %v1051 = vunpack.c.l.b16 %v588
        %v1052 = vunpack.c.l.b16 %v589
        %v1053 = vunpack.c.l.b16 %v590
        %v1054 = vunpack.c.l.b16 %v591
        %v1055 = vunpack.c.l.b16 %v592
        %v1056 = vpack.c.b16 %v1041, %v1040
        %v1057 = vpack.c.b16 %v1043, %v1042
        %v1058 = vpack.c.b16 %v1045, %v1044
        %v1059 = vpack.c.b16 %v1047, %v1046
        %v1060 = vpack.c.b16 %v1049, %v1048
        %v1061 = vpack.c.b16 %v1051, %v1050
        %v1062 = vpack.c.b16 %v1053, %v1052
        %v1063 = vpack.c.b16 %v1055, %v1054
        %1072 = vmatprep.subr.bf16.mxu0 0
        %1073 = vmatpush1.bf16.xpose.msra.mxu0 %v1063
        %1074 = vmatprep.subr.bf16.mxu0 0
        %1075 = vmatpush1.bf16.xpose.msra.mxu0 %v1062
        %1076 = vmatprep.subr.bf16.mxu0 0
        %1077 = vmatpush1.bf16.xpose.msra.mxu0 %v1061
        %1078 = vmatprep.subr.bf16.mxu0 0
        %1079 = vmatpush1.bf16.xpose.msra.mxu0 %v1060
        %1080 = vmatprep.subr.bf16.mxu0 0
        %1081 = vmatpush1.bf16.xpose.msra.mxu0 %v1059
        %1082 = vmatprep.subr.bf16.mxu0 0
        %1083 = vmatpush1.bf16.xpose.msra.mxu0 %v1058
        %1084 = vmatprep.subr.bf16.mxu0 0
        %1085 = vmatpush1.bf16.xpose.msra.mxu0 %v1057
        %1086 = vmatprep.subr.bf16.mxu0 0
        %1087 = vmatpush1.bf16.xpose.msra.mxu0 %v1056
        %1088 = vmatprep.subr.bf16.mxu0 0
        %1089 = vmatpush2.bf16.xpose.msra.mxu0 0
        %1090 = vmatprep.subr.bf16.mxu0 0
        %1091 = vmatpush2.bf16.xpose.msra.mxu0 0
        %1092 = vmatprep.subr.bf16.mxu0 0
        %1093 = vmatpush2.bf16.xpose.msra.mxu0 0
        %1094 = vmatprep.subr.bf16.mxu0 0
        %1095 = vmatpush2.bf16.xpose.msra.mxu0 0
        %1096 = vmatprep.subr.bf16.mxu0 0
        %1097 = vmatpush2.bf16.xpose.msra.mxu0 0
        %1098 = vmatprep.subr.bf16.mxu0 0
        %1099 = vmatpush2.bf16.xpose.msra.mxu0 0
        %1100 = vmatprep.subr.bf16.mxu0 0
        %1101 = vmatpush2.bf16.xpose.msra.mxu0 0
        %1102 = vmatprep.subr.bf16.mxu0 0
        %1103 = vmatpush2.bf16.xpose.msra.mxu0 0
        %1104 = vmatprep.mubr.bf16.mxu0 0
        %1105 = vmatmul.mubr.bf16.gmra.mxu0 %v1009
        %v1106 = vpop.f32.mrf.mxu0
        %v1107 = vadd.f32 %v1022, %v1106
        %v1108 = vpop.f32.mrf.mxu0
        %v1109 = vpop.f32.mrf.mxu0
        %v1110 = vadd.f32 %v1022, %v1109
        %v1111 = vpop.f32.mrf.mxu0
        %1112 = vmatprep.mubr.bf16.mxu0 0
        %1113 = vmatmul.mubr.bf16.gmra.mxu0 %v1010
        %v1114 = vpop.f32.mrf.mxu0
        %v1115 = vadd.f32 %v1022, %v1114
        %v1116 = vpop.f32.mrf.mxu0
        %v1117 = vpop.f32.mrf.mxu0
        %v1118 = vadd.f32 %v1022, %v1117
        %v1119 = vpop.f32.mrf.mxu0
        %1120 = vmatprep.mubr.bf16.mxu0 0
        %1121 = vmatmul.mubr.bf16.gmra.mxu0 %v1011
        %v1122 = vpop.f32.mrf.mxu0
        %v1123 = vadd.f32 %v1022, %v1122
        %v1124 = vpop.f32.mrf.mxu0
        %v1125 = vpop.f32.mrf.mxu0
        %v1126 = vadd.f32 %v1022, %v1125
        %v1127 = vpop.f32.mrf.mxu0
        %1128 = vmatprep.mubr.bf16.mxu0 0
        %1129 = vmatmul.mubr.bf16.gmra.mxu0 %v1012
        %v1130 = vpop.f32.mrf.mxu0
        %v1131 = vadd.f32 %v1022, %v1130
        %v1132 = vpop.f32.mrf.mxu0
        %v1133 = vpop.f32.mrf.mxu0
        %v1134 = vadd.f32 %v1022, %v1133
        %v1135 = vpop.f32.mrf.mxu0
        %1136 = vmatprep.mubr.bf16.mxu0 0
        %1137 = vmatmul.mubr.bf16.gmra.mxu0 %v1013
        %v1138 = vpop.f32.mrf.mxu0
        %v1139 = vadd.f32 %v1022, %v1138
        %v1140 = vpop.f32.mrf.mxu0
        %v1141 = vpop.f32.mrf.mxu0
        %v1142 = vadd.f32 %v1022, %v1141
        %v1143 = vpop.f32.mrf.mxu0
        %1144 = vmatprep.mubr.bf16.mxu0 0
        %1145 = vmatmul.mubr.bf16.gmra.mxu0 %v1014
        %v1146 = vpop.f32.mrf.mxu0
        %v1147 = vadd.f32 %v1022, %v1146
        %v1148 = vpop.f32.mrf.mxu0
        %v1149 = vpop.f32.mrf.mxu0
        %v1150 = vadd.f32 %v1022, %v1149
        %v1151 = vpop.f32.mrf.mxu0
        %1152 = vmatprep.mubr.bf16.mxu0 0
        %1153 = vmatmul.mubr.bf16.gmra.mxu0 %v1015
        %v1154 = vpop.f32.mrf.mxu0
        %v1155 = vadd.f32 %v1022, %v1154
        %v1156 = vpop.f32.mrf.mxu0
        %v1157 = vpop.f32.mrf.mxu0
        %v1158 = vadd.f32 %v1022, %v1157
        %v1159 = vpop.f32.mrf.mxu0
        %1160 = vmatprep.mubr.bf16.mxu0 0
        %1161 = vmatmul.mubr.bf16.gmra.mxu0 %v1016
        %v1162 = vpop.f32.mrf.mxu0
        %v1163 = vadd.f32 %v1022, %v1162
        %v1164 = vpop.f32.mrf.mxu0
        %v1165 = vpop.f32.mrf.mxu0
        %v1166 = vadd.f32 %v1022, %v1165
        %v1167 = vpop.f32.mrf.mxu0
        %1168 = vdwg.mxu0
        %1169 = vmax.xlane.f32.xlu0 %v1107
        %v1170 = vpop.xlane.xlu0 %1169
        %1171 = vmax.xlane.f32.xlu0 %v1110
        %v1172 = vpop.xlane.xlu0 %1171
        %1173 = vmax.xlane.f32.xlu0 %v1115
        %v1174 = vpop.xlane.xlu0 %1173
        %1175 = vmax.xlane.f32.xlu0 %v1118
        %v1176 = vpop.xlane.xlu0 %1175
        %1177 = vmax.xlane.f32.xlu0 %v1123
        %v1178 = vpop.xlane.xlu0 %1177
        %1179 = vmax.xlane.f32.xlu0 %v1126
        %v1180 = vpop.xlane.xlu0 %1179
        %1181 = vmax.xlane.f32.xlu0 %v1131
        %v1182 = vpop.xlane.xlu0 %1181
        %1183 = vmax.xlane.f32.xlu0 %v1134
        %v1184 = vpop.xlane.xlu0 %1183
        %1185 = vmax.xlane.f32.xlu0 %v1139
        %v1186 = vpop.xlane.xlu0 %1185
        %1187 = vmax.xlane.f32.xlu0 %v1142
        %v1188 = vpop.xlane.xlu0 %1187
        %1189 = vmax.xlane.f32.xlu0 %v1147
        %v1190 = vpop.xlane.xlu0 %1189
        %1191 = vmax.xlane.f32.xlu0 %v1150
        %v1192 = vpop.xlane.xlu0 %1191
        %1193 = vmax.xlane.f32.xlu0 %v1155
        %v1194 = vpop.xlane.xlu0 %1193
        %1195 = vmax.xlane.f32.xlu0 %v1158
        %v1196 = vpop.xlane.xlu0 %1195
        %1197 = vmax.xlane.f32.xlu0 %v1163
        %v1198 = vpop.xlane.xlu0 %1197
        %1199 = vmax.xlane.f32.xlu0 %v1166
        %v1200 = vpop.xlane.xlu0 %1199
        %v1201 = vsub.f32 %v1107, %v1170
        %v1202 = vsub.f32 %v1110, %v1172
        %v1203 = vsub.f32 %v1115, %v1174
        %v1204 = vsub.f32 %v1118, %v1176
        %v1205 = vsub.f32 %v1123, %v1178
        %v1206 = vsub.f32 %v1126, %v1180
        %v1207 = vsub.f32 %v1131, %v1182
        %v1208 = vsub.f32 %v1134, %v1184
        %v1209 = vsub.f32 %v1139, %v1186
        %v1210 = vsub.f32 %v1142, %v1188
        %v1211 = vsub.f32 %v1147, %v1190
        %v1212 = vsub.f32 %v1150, %v1192
        %v1213 = vsub.f32 %v1155, %v1194
        %v1214 = vsub.f32 %v1158, %v1196
        %v1215 = vsub.f32 %v1163, %v1198
        %v1216 = vsub.f32 %v1166, %v1200
        %v1217 = vmul.f32 %v1201, 1.442695
        %v1218 = vpow.pop %v1217
        %v1219 = vmul.f32 %v1202, 1.442695
        %v1220 = vpow.pop %v1219
        %v1221 = vmul.f32 %v1203, 1.442695
        %v1222 = vpow.pop %v1221
        %v1223 = vmul.f32 %v1204, 1.442695
        %v1224 = vpow.pop %v1223
        %v1225 = vmul.f32 %v1205, 1.442695
        %v1226 = vpow.pop %v1225
        %v1227 = vmul.f32 %v1206, 1.442695
        %v1228 = vpow.pop %v1227
        %v1229 = vmul.f32 %v1207, 1.442695
        %v1230 = vpow.pop %v1229
        %v1231 = vmul.f32 %v1208, 1.442695
        %v1232 = vpow.pop %v1231
        %v1233 = vmul.f32 %v1209, 1.442695
        %v1234 = vpow.pop %v1233
        %v1235 = vmul.f32 %v1210, 1.442695
        %v1236 = vpow.pop %v1235
        %v1237 = vmul.f32 %v1211, 1.442695
        %v1238 = vpow.pop %v1237
        %v1239 = vmul.f32 %v1212, 1.442695
        %v1240 = vpow.pop %v1239
        %v1241 = vmul.f32 %v1213, 1.442695
        %v1242 = vpow.pop %v1241
        %v1243 = vmul.f32 %v1214, 1.442695
        %v1244 = vpow.pop %v1243
        %v1245 = vmul.f32 %v1215, 1.442695
        %v1246 = vpow.pop %v1245
        %v1247 = vmul.f32 %v1216, 1.442695
        %v1248 = vpow.pop %v1247
        %1249 = vadd.xlane.f32.xlu0 %v1218
        %v1250 = vpop.xlane.xlu0 %1249
        %1251 = vadd.xlane.f32.xlu0 %v1220
        %v1252 = vpop.xlane.xlu0 %1251
        %1253 = vadd.xlane.f32.xlu0 %v1222
        %v1254 = vpop.xlane.xlu0 %1253
        %1255 = vadd.xlane.f32.xlu0 %v1224
        %v1256 = vpop.xlane.xlu0 %1255
        %1257 = vadd.xlane.f32.xlu0 %v1226
        %v1258 = vpop.xlane.xlu0 %1257
        %1259 = vadd.xlane.f32.xlu0 %v1228
        %v1260 = vpop.xlane.xlu0 %1259
        %1261 = vadd.xlane.f32.xlu0 %v1230
        %v1262 = vpop.xlane.xlu0 %1261
        %1263 = vadd.xlane.f32.xlu0 %v1232
        %v1264 = vpop.xlane.xlu0 %1263
        %1265 = vadd.xlane.f32.xlu0 %v1234
        %v1266 = vpop.xlane.xlu0 %1265
        %1267 = vadd.xlane.f32.xlu0 %v1236
        %v1268 = vpop.xlane.xlu0 %1267
        %1269 = vadd.xlane.f32.xlu0 %v1238
        %v1270 = vpop.xlane.xlu0 %1269
        %1271 = vadd.xlane.f32.xlu0 %v1240
        %v1272 = vpop.xlane.xlu0 %1271
        %1273 = vadd.xlane.f32.xlu0 %v1242
        %v1274 = vpop.xlane.xlu0 %1273
        %1275 = vadd.xlane.f32.xlu0 %v1244
        %v1276 = vpop.xlane.xlu0 %1275
        %1277 = vadd.xlane.f32.xlu0 %v1246
        %v1278 = vpop.xlane.xlu0 %1277
        %1279 = vadd.xlane.f32.xlu0 %v1248
        %v1280 = vpop.xlane.xlu0 %1279
        %v1281 = vrcp.pop %v1250
        %v1282 = vrcp.pop %v1252
        %v1283 = vrcp.pop %v1254
        %v1284 = vrcp.pop %v1256
        %v1285 = vrcp.pop %v1258
        %v1286 = vrcp.pop %v1260
        %v1287 = vrcp.pop %v1262
        %v1288 = vrcp.pop %v1264
        %v1289 = vrcp.pop %v1266
        %v1290 = vrcp.pop %v1268
        %v1291 = vrcp.pop %v1270
        %v1292 = vrcp.pop %v1272
        %v1293 = vrcp.pop %v1274
        %v1294 = vrcp.pop %v1276
        %v1295 = vrcp.pop %v1278
        %v1296 = vrcp.pop %v1280
        %v1297 = vmul.f32 %v1218, %v1281
        %v1298 = vmul.f32 %v1220, %v1282
        %v1299 = vmul.f32 %v1222, %v1283
        %v1300 = vmul.f32 %v1224, %v1284
        %v1301 = vmul.f32 %v1226, %v1285
        %v1302 = vmul.f32 %v1228, %v1286
        %v1303 = vmul.f32 %v1230, %v1287
        %v1304 = vmul.f32 %v1232, %v1288
        %v1305 = vmul.f32 %v1234, %v1289
        %v1306 = vmul.f32 %v1236, %v1290
        %v1307 = vmul.f32 %v1238, %v1291
        %v1308 = vmul.f32 %v1240, %v1292
        %v1309 = vmul.f32 %v1242, %v1293
        %v1310 = vmul.f32 %v1244, %v1294
        %v1311 = vmul.f32 %v1246, %v1295
        %v1312 = vmul.f32 %v1248, %v1296
        %v1313 = vpack.c.bf16 %v1298, %v1297
        %v1314 = vpack.c.bf16 %v1300, %v1299
        %v1315 = vpack.c.bf16 %v1302, %v1301
        %v1316 = vpack.c.bf16 %v1304, %v1303
        %v1317 = vpack.c.bf16 %v1306, %v1305
        %v1318 = vpack.c.bf16 %v1308, %v1307
        %v1319 = vpack.c.bf16 %v1310, %v1309
        %v1320 = vpack.c.bf16 %v1312, %v1311
        %v1337 = vunpack.c.l.b16 %v593
        %v1338 = vunpack.c.l.b16 %v594
        %v1339 = vunpack.c.l.b16 %v595
        %v1340 = vunpack.c.l.b16 %v596
        %v1341 = vunpack.c.l.b16 %v597
        %v1342 = vunpack.c.l.b16 %v598
        %v1343 = vunpack.c.l.b16 %v599
        %v1344 = vunpack.c.l.b16 %v600
        %v1345 = vunpack.c.l.b16 %v601
        %v1346 = vunpack.c.l.b16 %v602
        %v1347 = vunpack.c.l.b16 %v603
        %v1348 = vunpack.c.l.b16 %v604
        %v1349 = vunpack.c.l.b16 %v605
        %v1350 = vunpack.c.l.b16 %v606
        %v1351 = vunpack.c.l.b16 %v607
        %v1352 = vunpack.c.l.b16 %v608
        %v1353 = vpack.c.b16 %v1338, %v1337
        %v1354 = vpack.c.b16 %v1340, %v1339
        %v1355 = vpack.c.b16 %v1342, %v1341
        %v1356 = vpack.c.b16 %v1344, %v1343
        %v1357 = vpack.c.b16 %v1346, %v1345
        %v1358 = vpack.c.b16 %v1348, %v1347
        %v1359 = vpack.c.b16 %v1350, %v1349
        %v1360 = vpack.c.b16 %v1352, %v1351
        %1369 = vmatprep.subr.bf16.mxu0 0
        %1370 = vmatpush1.bf16.msra.mxu0 %v1360
        %1371 = vmatprep.subr.bf16.mxu0 0
        %1372 = vmatpush1.bf16.msra.mxu0 %v1359
        %1373 = vmatprep.subr.bf16.mxu0 0
        %1374 = vmatpush1.bf16.msra.mxu0 %v1358
        %1375 = vmatprep.subr.bf16.mxu0 0
        %1376 = vmatpush1.bf16.msra.mxu0 %v1357
        %1377 = vmatprep.subr.bf16.mxu0 0
        %1378 = vmatpush1.bf16.msra.mxu0 %v1356
        %1379 = vmatprep.subr.bf16.mxu0 0
        %1380 = vmatpush1.bf16.msra.mxu0 %v1355
        %1381 = vmatprep.subr.bf16.mxu0 0
        %1382 = vmatpush1.bf16.msra.mxu0 %v1354
        %1383 = vmatprep.subr.bf16.mxu0 0
        %1384 = vmatpush1.bf16.msra.mxu0 %v1353
        %1385 = vmatprep.subr.bf16.mxu0 0
        %1386 = vmatpush2.bf16.msra.mxu0 0
        %1387 = vmatprep.subr.bf16.mxu0 0
        %1388 = vmatpush2.bf16.msra.mxu0 0
        %1389 = vmatprep.subr.bf16.mxu0 0
        %1390 = vmatpush2.bf16.msra.mxu0 0
        %1391 = vmatprep.subr.bf16.mxu0 0
        %1392 = vmatpush2.bf16.msra.mxu0 0
        %1393 = vmatprep.subr.bf16.mxu0 0
        %1394 = vmatpush2.bf16.msra.mxu0 0
        %1395 = vmatprep.subr.bf16.mxu0 0
        %1396 = vmatpush2.bf16.msra.mxu0 0
        %1397 = vmatprep.subr.bf16.mxu0 0
        %1398 = vmatpush2.bf16.msra.mxu0 0
        %1399 = vmatprep.subr.bf16.mxu0 0
        %1400 = vmatpush2.bf16.msra.mxu0 0
        %1401 = vmatprep.mubr.bf16.mxu0 0
        %1402 = vmatmul.mubr.bf16.gmra.mxu0 %v1313
        %v1403 = vpop.f32.mrf.mxu0
        %v1404 = vadd.f32 0.0, %v1403
        %v1405 = vpop.f32.mrf.mxu0
        %v1406 = vpop.f32.mrf.mxu0
        %v1407 = vadd.f32 0.0, %v1406
        %v1408 = vpop.f32.mrf.mxu0
        %1409 = vmatprep.mubr.bf16.mxu0 0
        %1410 = vmatmul.mubr.bf16.gmra.mxu0 %v1314
        %v1411 = vpop.f32.mrf.mxu0
        %v1412 = vadd.f32 0.0, %v1411
        %v1413 = vpop.f32.mrf.mxu0
        %v1414 = vpop.f32.mrf.mxu0
        %v1415 = vadd.f32 0.0, %v1414
        %v1416 = vpop.f32.mrf.mxu0
        %1417 = vmatprep.mubr.bf16.mxu0 0
        %1418 = vmatmul.mubr.bf16.gmra.mxu0 %v1315
        %v1419 = vpop.f32.mrf.mxu0
        %v1420 = vadd.f32 0.0, %v1419
        %v1421 = vpop.f32.mrf.mxu0
        %v1422 = vpop.f32.mrf.mxu0
        %v1423 = vadd.f32 0.0, %v1422
        %v1424 = vpop.f32.mrf.mxu0
        %1425 = vmatprep.mubr.bf16.mxu0 0
        %1426 = vmatmul.mubr.bf16.gmra.mxu0 %v1316
        %v1427 = vpop.f32.mrf.mxu0
        %v1428 = vadd.f32 0.0, %v1427
        %v1429 = vpop.f32.mrf.mxu0
        %v1430 = vpop.f32.mrf.mxu0
        %v1431 = vadd.f32 0.0, %v1430
        %v1432 = vpop.f32.mrf.mxu0
        %1433 = vmatprep.mubr.bf16.mxu0 0
        %1434 = vmatmul.mubr.bf16.gmra.mxu0 %v1317
        %v1435 = vpop.f32.mrf.mxu0
        %v1436 = vadd.f32 0.0, %v1435
        %v1437 = vpop.f32.mrf.mxu0
        %v1438 = vpop.f32.mrf.mxu0
        %v1439 = vadd.f32 0.0, %v1438
        %v1440 = vpop.f32.mrf.mxu0
        %1441 = vmatprep.mubr.bf16.mxu0 0
        %1442 = vmatmul.mubr.bf16.gmra.mxu0 %v1318
        %v1443 = vpop.f32.mrf.mxu0
        %v1444 = vadd.f32 0.0, %v1443
        %v1445 = vpop.f32.mrf.mxu0
        %v1446 = vpop.f32.mrf.mxu0
        %v1447 = vadd.f32 0.0, %v1446
        %v1448 = vpop.f32.mrf.mxu0
        %1449 = vmatprep.mubr.bf16.mxu0 0
        %1450 = vmatmul.mubr.bf16.gmra.mxu0 %v1319
        %v1451 = vpop.f32.mrf.mxu0
        %v1452 = vadd.f32 0.0, %v1451
        %v1453 = vpop.f32.mrf.mxu0
        %v1454 = vpop.f32.mrf.mxu0
        %v1455 = vadd.f32 0.0, %v1454
        %v1456 = vpop.f32.mrf.mxu0
        %1457 = vmatprep.mubr.bf16.mxu0 0
        %1458 = vmatmul.mubr.bf16.gmra.mxu0 %v1320
        %v1459 = vpop.f32.mrf.mxu0
        %v1460 = vadd.f32 0.0, %v1459
        %v1461 = vpop.f32.mrf.mxu0
        %v1462 = vpop.f32.mrf.mxu0
        %v1463 = vadd.f32 0.0, %v1462
        %v1464 = vpop.f32.mrf.mxu0
        %1465 = vdwg.mxu0
        %v1466 = vpack.c.bf16 %v1407, %v1404
        %v1467 = vpack.c.bf16 %v1415, %v1412
        %v1468 = vpack.c.bf16 %v1423, %v1420
        %v1469 = vpack.c.bf16 %v1431, %v1428
        %v1470 = vpack.c.bf16 %v1439, %v1436
        %v1471 = vpack.c.bf16 %v1447, %v1444
        %v1472 = vpack.c.bf16 %v1455, %v1452
        %v1473 = vpack.c.bf16 %v1463, %v1460
        %v1474 = vld [vmem:[#allocation11] sm:$0xf]
        %v1475 = vld [vmem:[#allocation11 + $0x4] sm:$0xf]
        %v1476 = vld [vmem:[#allocation11 + $0x8] sm:$0xf]
        %v1477 = vld [vmem:[#allocation11 + $0xc] sm:$0xf]
        %v1478 = vld [vmem:[#allocation11 + $0x10] sm:$0xf]
        %v1479 = vld [vmem:[#allocation11 + $0x14] sm:$0xf]
        %v1480 = vld [vmem:[#allocation11 + $0x18] sm:$0xf]
        %v1481 = vld [vmem:[#allocation11 + $0x1c] sm:$0xf]
        %v1482 = vld [vmem:[#allocation11 + $0x20] sm:$0xf]
        %v1483 = vld [vmem:[#allocation11 + $0x24] sm:$0xf]
        %v1484 = vld [vmem:[#allocation11 + $0x28] sm:$0xf]
        %v1485 = vld [vmem:[#allocation11 + $0x2c] sm:$0xf]
        %v1486 = vld [vmem:[#allocation11 + $0x30] sm:$0xf]
        %v1487 = vld [vmem:[#allocation11 + $0x34] sm:$0xf]
        %v1488 = vld [vmem:[#allocation11 + $0x38] sm:$0xf]
        %v1489 = vld [vmem:[#allocation11 + $0x3c] sm:$0xf]
        %v1490 = vpack.c.bf16 %v994, %v993
        %v1491 = vpack.c.bf16 %v996, %v995
        %v1492 = vpack.c.bf16 %v998, %v997
        %v1493 = vpack.c.bf16 %v1000, %v999
        %v1494 = vpack.c.bf16 %v1002, %v1001
        %v1495 = vpack.c.bf16 %v1004, %v1003
        %v1496 = vpack.c.bf16 %v1006, %v1005
        %v1497 = vpack.c.bf16 %v1008, %v1007
        %v1498 = vld [vmem:[#allocation13] sm:$0xf]
        %v1499 = vld [vmem:[#allocation13 + $0x4] sm:$0xf]
        %v1500 = vld [vmem:[#allocation13 + $0x8] sm:$0xf]
        %v1501 = vld [vmem:[#allocation13 + $0xc] sm:$0xf]
        %v1502 = vld [vmem:[#allocation13 + $0x10] sm:$0xf]
        %v1503 = vld [vmem:[#allocation13 + $0x14] sm:$0xf]
        %v1504 = vld [vmem:[#allocation13 + $0x18] sm:$0xf]
        %v1505 = vld [vmem:[#allocation13 + $0x1c] sm:$0xf]
        %v1506 = vld [vmem:[#allocation13 + $0x20] sm:$0xf]
        %v1507 = vld [vmem:[#allocation13 + $0x24] sm:$0xf]
        %v1508 = vld [vmem:[#allocation13 + $0x28] sm:$0xf]
        %v1509 = vld [vmem:[#allocation13 + $0x2c] sm:$0xf]
        %v1510 = vld [vmem:[#allocation13 + $0x30] sm:$0xf]
        %v1511 = vld [vmem:[#allocation13 + $0x34] sm:$0xf]
        %v1512 = vld [vmem:[#allocation13 + $0x38] sm:$0xf]
        %v1513 = vld [vmem:[#allocation13 + $0x3c] sm:$0xf]
        %v1530 = vunpack.c.l.b16 %v1498
        %v1531 = vunpack.c.l.b16 %v1499
        %v1532 = vunpack.c.l.b16 %v1500
        %v1533 = vunpack.c.l.b16 %v1501
        %v1534 = vunpack.c.l.b16 %v1502
        %v1535 = vunpack.c.l.b16 %v1503
        %v1536 = vunpack.c.l.b16 %v1504
        %v1537 = vunpack.c.l.b16 %v1505
        %v1538 = vunpack.c.l.b16 %v1506
        %v1539 = vunpack.c.l.b16 %v1507
        %v1540 = vunpack.c.l.b16 %v1508
        %v1541 = vunpack.c.l.b16 %v1509
        %v1542 = vunpack.c.l.b16 %v1510
        %v1543 = vunpack.c.l.b16 %v1511
        %v1544 = vunpack.c.l.b16 %v1512
        %v1545 = vunpack.c.l.b16 %v1513
        %v1546 = vpack.c.b16 %v1531, %v1530
        %v1547 = vpack.c.b16 %v1533, %v1532
        %v1548 = vpack.c.b16 %v1535, %v1534
        %v1549 = vpack.c.b16 %v1537, %v1536
        %v1550 = vpack.c.b16 %v1539, %v1538
        %v1551 = vpack.c.b16 %v1541, %v1540
        %v1552 = vpack.c.b16 %v1543, %v1542
        %v1553 = vpack.c.b16 %v1545, %v1544
        %1562 = vmatprep.subr.bf16.mxu0 0
        %1563 = vmatpush1.bf16.msra.mxu0 %v1553
        %1564 = vmatprep.subr.bf16.mxu0 0
        %1565 = vmatpush1.bf16.msra.mxu0 %v1552
        %1566 = vmatprep.subr.bf16.mxu0 0
        %1567 = vmatpush1.bf16.msra.mxu0 %v1551
        %1568 = vmatprep.subr.bf16.mxu0 0
        %1569 = vmatpush1.bf16.msra.mxu0 %v1550
        %1570 = vmatprep.subr.bf16.mxu0 0
        %1571 = vmatpush1.bf16.msra.mxu0 %v1549
        %1572 = vmatprep.subr.bf16.mxu0 0
        %1573 = vmatpush1.bf16.msra.mxu0 %v1548
        %1574 = vmatprep.subr.bf16.mxu0 0
        %1575 = vmatpush1.bf16.msra.mxu0 %v1547
        %1576 = vmatprep.subr.bf16.mxu0 0
        %1577 = vmatpush1.bf16.msra.mxu0 %v1546
        %1578 = vmatprep.subr.bf16.mxu0 0
        %1579 = vmatpush2.bf16.msra.mxu0 0
        %1580 = vmatprep.subr.bf16.mxu0 0
        %1581 = vmatpush2.bf16.msra.mxu0 0
        %1582 = vmatprep.subr.bf16.mxu0 0
        %1583 = vmatpush2.bf16.msra.mxu0 0
        %1584 = vmatprep.subr.bf16.mxu0 0
        %1585 = vmatpush2.bf16.msra.mxu0 0
        %1586 = vmatprep.subr.bf16.mxu0 0
        %1587 = vmatpush2.bf16.msra.mxu0 0
        %1588 = vmatprep.subr.bf16.mxu0 0
        %1589 = vmatpush2.bf16.msra.mxu0 0
        %1590 = vmatprep.subr.bf16.mxu0 0
        %1591 = vmatpush2.bf16.msra.mxu0 0
        %1592 = vmatprep.subr.bf16.mxu0 0
        %1593 = vmatpush2.bf16.msra.mxu0 0
        %1594 = vmatprep.mubr.bf16.mxu0 0
        %1595 = vmatmul.mubr.bf16.gmra.mxu0 %v1490
        %v1596 = vpop.f32.mrf.mxu0
        %v1597 = vadd.f32 0.0, %v1596
        %v1598 = vpop.f32.mrf.mxu0
        %v1599 = vpop.f32.mrf.mxu0
        %v1600 = vadd.f32 0.0, %v1599
        %v1601 = vpop.f32.mrf.mxu0
        %1602 = vmatprep.mubr.bf16.mxu0 0
        %1603 = vmatmul.mubr.bf16.gmra.mxu0 %v1491
        %v1604 = vpop.f32.mrf.mxu0
        %v1605 = vadd.f32 0.0, %v1604
        %v1606 = vpop.f32.mrf.mxu0
        %v1607 = vpop.f32.mrf.mxu0
        %v1608 = vadd.f32 0.0, %v1607
        %v1609 = vpop.f32.mrf.mxu0
        %1610 = vmatprep.mubr.bf16.mxu0 0
        %1611 = vmatmul.mubr.bf16.gmra.mxu0 %v1492
        %v1612 = vpop.f32.mrf.mxu0
        %v1613 = vadd.f32 0.0, %v1612
        %v1614 = vpop.f32.mrf.mxu0
        %v1615 = vpop.f32.mrf.mxu0
        %v1616 = vadd.f32 0.0, %v1615
        %v1617 = vpop.f32.mrf.mxu0
        %1618 = vmatprep.mubr.bf16.mxu0 0
        %1619 = vmatmul.mubr.bf16.gmra.mxu0 %v1493
        %v1620 = vpop.f32.mrf.mxu0
        %v1621 = vadd.f32 0.0, %v1620
        %v1622 = vpop.f32.mrf.mxu0
        %v1623 = vpop.f32.mrf.mxu0
        %v1624 = vadd.f32 0.0, %v1623
        %v1625 = vpop.f32.mrf.mxu0
        %1626 = vmatprep.mubr.bf16.mxu0 0
        %1627 = vmatmul.mubr.bf16.gmra.mxu0 %v1494
        %v1628 = vpop.f32.mrf.mxu0
        %v1629 = vadd.f32 0.0, %v1628
        %v1630 = vpop.f32.mrf.mxu0
        %v1631 = vpop.f32.mrf.mxu0
        %v1632 = vadd.f32 0.0, %v1631
        %v1633 = vpop.f32.mrf.mxu0
        %1634 = vmatprep.mubr.bf16.mxu0 0
        %1635 = vmatmul.mubr.bf16.gmra.mxu0 %v1495
        %v1636 = vpop.f32.mrf.mxu0
        %v1637 = vadd.f32 0.0, %v1636
        %v1638 = vpop.f32.mrf.mxu0
        %v1639 = vpop.f32.mrf.mxu0
        %v1640 = vadd.f32 0.0, %v1639
        %v1641 = vpop.f32.mrf.mxu0
        %1642 = vmatprep.mubr.bf16.mxu0 0
        %1643 = vmatmul.mubr.bf16.gmra.mxu0 %v1496
        %v1644 = vpop.f32.mrf.mxu0
        %v1645 = vadd.f32 0.0, %v1644
        %v1646 = vpop.f32.mrf.mxu0
        %v1647 = vpop.f32.mrf.mxu0
        %v1648 = vadd.f32 0.0, %v1647
        %v1649 = vpop.f32.mrf.mxu0
        %1650 = vmatprep.mubr.bf16.mxu0 0
        %1651 = vmatmul.mubr.bf16.gmra.mxu0 %v1497
        %v1652 = vpop.f32.mrf.mxu0
        %v1653 = vadd.f32 0.0, %v1652
        %v1654 = vpop.f32.mrf.mxu0
        %v1655 = vpop.f32.mrf.mxu0
        %v1656 = vadd.f32 0.0, %v1655
        %v1657 = vpop.f32.mrf.mxu0
        %1658 = vdwg.mxu0
        %v1675 = vunpack.c.l.b16 %v1474
        %v1676 = vunpack.c.l.b16 %v1475
        %v1677 = vunpack.c.l.b16 %v1476
        %v1678 = vunpack.c.l.b16 %v1477
        %v1679 = vunpack.c.l.b16 %v1478
        %v1680 = vunpack.c.l.b16 %v1479
        %v1681 = vunpack.c.l.b16 %v1480
        %v1682 = vunpack.c.l.b16 %v1481
        %v1683 = vunpack.c.l.b16 %v1482
        %v1684 = vunpack.c.l.b16 %v1483
        %v1685 = vunpack.c.l.b16 %v1484
        %v1686 = vunpack.c.l.b16 %v1485
        %v1687 = vunpack.c.l.b16 %v1486
        %v1688 = vunpack.c.l.b16 %v1487
        %v1689 = vunpack.c.l.b16 %v1488
        %v1690 = vunpack.c.l.b16 %v1489
        %v1691 = vpack.c.b16 %v1676, %v1675
        %v1692 = vpack.c.b16 %v1678, %v1677
        %v1693 = vpack.c.b16 %v1680, %v1679
        %v1694 = vpack.c.b16 %v1682, %v1681
        %v1695 = vpack.c.b16 %v1684, %v1683
        %v1696 = vpack.c.b16 %v1686, %v1685
        %v1697 = vpack.c.b16 %v1688, %v1687
        %v1698 = vpack.c.b16 %v1690, %v1689
        %1707 = vmatprep.subr.bf16.mxu0 0
        %1708 = vmatpush1.bf16.msra.mxu0 %v1698
        %1709 = vmatprep.subr.bf16.mxu0 0
        %1710 = vmatpush1.bf16.msra.mxu0 %v1697
        %1711 = vmatprep.subr.bf16.mxu0 0
        %1712 = vmatpush1.bf16.msra.mxu0 %v1696
        %1713 = vmatprep.subr.bf16.mxu0 0
        %1714 = vmatpush1.bf16.msra.mxu0 %v1695
        %1715 = vmatprep.subr.bf16.mxu0 0
        %1716 = vmatpush1.bf16.msra.mxu0 %v1694
        %1717 = vmatprep.subr.bf16.mxu0 0
        %1718 = vmatpush1.bf16.msra.mxu0 %v1693
        %1719 = vmatprep.subr.bf16.mxu0 0
        %1720 = vmatpush1.bf16.msra.mxu0 %v1692
        %1721 = vmatprep.subr.bf16.mxu0 0
        %1722 = vmatpush1.bf16.msra.mxu0 %v1691
        %1723 = vmatprep.subr.bf16.mxu0 0
        %1724 = vmatpush2.bf16.msra.mxu0 0
        %1725 = vmatprep.subr.bf16.mxu0 0
        %1726 = vmatpush2.bf16.msra.mxu0 0
        %1727 = vmatprep.subr.bf16.mxu0 0
        %1728 = vmatpush2.bf16.msra.mxu0 0
        %1729 = vmatprep.subr.bf16.mxu0 0
        %1730 = vmatpush2.bf16.msra.mxu0 0
        %1731 = vmatprep.subr.bf16.mxu0 0
        %1732 = vmatpush2.bf16.msra.mxu0 0
        %1733 = vmatprep.subr.bf16.mxu0 0
        %1734 = vmatpush2.bf16.msra.mxu0 0
        %1735 = vmatprep.subr.bf16.mxu0 0
        %1736 = vmatpush2.bf16.msra.mxu0 0
        %1737 = vmatprep.subr.bf16.mxu0 0
        %1738 = vmatpush2.bf16.msra.mxu0 0
        %1739 = vmatprep.mubr.bf16.mxu0 0
        %1740 = vmatmul.mubr.bf16.gmra.mxu0 %v1466
        %v1741 = vpop.f32.mrf.mxu0
        %v1742 = vadd.f32 %v1597, %v1741
        %v1743 = vpop.f32.mrf.mxu0
        %v1744 = vpop.f32.mrf.mxu0
        %v1745 = vadd.f32 %v1600, %v1744
        %v1746 = vpop.f32.mrf.mxu0
        %1747 = vmatprep.mubr.bf16.mxu0 0
        %1748 = vmatmul.mubr.bf16.gmra.mxu0 %v1467
        %v1749 = vpop.f32.mrf.mxu0
        %v1750 = vadd.f32 %v1605, %v1749
        %v1751 = vpop.f32.mrf.mxu0
        %v1752 = vpop.f32.mrf.mxu0
        %v1753 = vadd.f32 %v1608, %v1752
        %v1754 = vpop.f32.mrf.mxu0
        %1755 = vmatprep.mubr.bf16.mxu0 0
        %1756 = vmatmul.mubr.bf16.gmra.mxu0 %v1468
        %v1757 = vpop.f32.mrf.mxu0
        %v1758 = vadd.f32 %v1613, %v1757
        %v1759 = vpop.f32.mrf.mxu0
        %v1760 = vpop.f32.mrf.mxu0
        %v1761 = vadd.f32 %v1616, %v1760
        %v1762 = vpop.f32.mrf.mxu0
        %1763 = vmatprep.mubr.bf16.mxu0 0
        %1764 = vmatmul.mubr.bf16.gmra.mxu0 %v1469
        %v1765 = vpop.f32.mrf.mxu0
        %v1766 = vadd.f32 %v1621, %v1765
        %v1767 = vpop.f32.mrf.mxu0
        %v1768 = vpop.f32.mrf.mxu0
        %v1769 = vadd.f32 %v1624, %v1768
        %v1770 = vpop.f32.mrf.mxu0
        %1771 = vmatprep.mubr.bf16.mxu0 0
        %1772 = vmatmul.mubr.bf16.gmra.mxu0 %v1470
        %v1773 = vpop.f32.mrf.mxu0
        %v1774 = vadd.f32 %v1629, %v1773
        %v1775 = vpop.f32.mrf.mxu0
        %v1776 = vpop.f32.mrf.mxu0
        %v1777 = vadd.f32 %v1632, %v1776
        %v1778 = vpop.f32.mrf.mxu0
        %1779 = vmatprep.mubr.bf16.mxu0 0
        %1780 = vmatmul.mubr.bf16.gmra.mxu0 %v1471
        %v1781 = vpop.f32.mrf.mxu0
        %v1782 = vadd.f32 %v1637, %v1781
        %v1783 = vpop.f32.mrf.mxu0
        %v1784 = vpop.f32.mrf.mxu0
        %v1785 = vadd.f32 %v1640, %v1784
        %v1786 = vpop.f32.mrf.mxu0
        %1787 = vmatprep.mubr.bf16.mxu0 0
        %1788 = vmatmul.mubr.bf16.gmra.mxu0 %v1472
        %v1789 = vpop.f32.mrf.mxu0
        %v1790 = vadd.f32 %v1645, %v1789
        %v1791 = vpop.f32.mrf.mxu0
        %v1792 = vpop.f32.mrf.mxu0
        %v1793 = vadd.f32 %v1648, %v1792
        %v1794 = vpop.f32.mrf.mxu0
        %1795 = vmatprep.mubr.bf16.mxu0 0
        %1796 = vmatmul.mubr.bf16.gmra.mxu0 %v1473
        %v1797 = vpop.f32.mrf.mxu0
        %v1798 = vadd.f32 %v1653, %v1797
        %v1799 = vpop.f32.mrf.mxu0
        %v1800 = vpop.f32.mrf.mxu0
        %v1801 = vadd.f32 %v1656, %v1800
        %v1802 = vpop.f32.mrf.mxu0
        %1803 = vdwg.mxu0
        %v1804 = vld [vmem:[%s10] sm:$0x1]
        %v1806 = vlaneseq
        %v1807 = vshrl.u32 %v1806, 7
        %v1808 = vsub.s32 0, %v1807
        %v1809 = vrot.slane %v1804, %v1808
        %v1811 = vadd.f32 %v1742, %v1809
        %v1812 = vadd.f32 %v1745, %v1809
        %v1813 = vadd.f32 %v1750, %v1809
        %v1814 = vadd.f32 %v1753, %v1809
        %v1815 = vadd.f32 %v1758, %v1809
        %v1816 = vadd.f32 %v1761, %v1809
        %v1817 = vadd.f32 %v1766, %v1809
        %v1818 = vadd.f32 %v1769, %v1809
        %v1819 = vadd.f32 %v1774, %v1809
        %v1820 = vadd.f32 %v1777, %v1809
        %v1821 = vadd.f32 %v1782, %v1809
        %v1822 = vadd.f32 %v1785, %v1809
        %v1823 = vadd.f32 %v1790, %v1809
        %v1824 = vadd.f32 %v1793, %v1809
        %v1825 = vadd.f32 %v1798, %v1809
        %v1826 = vadd.f32 %v1801, %v1809
        %v1827 = vmax.f32 %v1811, 0.0
        %v1828 = vmax.f32 %v1812, 0.0
        %v1829 = vmax.f32 %v1813, 0.0
        %v1830 = vmax.f32 %v1814, 0.0
        %v1831 = vmax.f32 %v1815, 0.0
        %v1832 = vmax.f32 %v1816, 0.0
        %v1833 = vmax.f32 %v1817, 0.0
        %v1834 = vmax.f32 %v1818, 0.0
        %v1835 = vmax.f32 %v1819, 0.0
        %v1836 = vmax.f32 %v1820, 0.0
        %v1837 = vmax.f32 %v1821, 0.0
        %v1838 = vmax.f32 %v1822, 0.0
        %v1839 = vmax.f32 %v1823, 0.0
        %v1840 = vmax.f32 %v1824, 0.0
        %v1841 = vmax.f32 %v1825, 0.0
        %v1842 = vmax.f32 %v1826, 0.0
        %v1843 = vpack.c.bf16 %v1828, %v1827
        %v1844 = vpack.c.bf16 %v1830, %v1829
        %v1845 = vpack.c.bf16 %v1832, %v1831
        %v1846 = vpack.c.bf16 %v1834, %v1833
        %v1847 = vpack.c.bf16 %v1836, %v1835
        %v1848 = vpack.c.bf16 %v1838, %v1837
        %v1849 = vpack.c.bf16 %v1840, %v1839
        %v1850 = vpack.c.bf16 %v1842, %v1841
        %v1859 = vunpack.c.l.b16 %v1843
        %v1860 = vunpack.c.h.b16 %v1843
        %v1861 = vunpack.c.l.b16 %v1844
        %v1862 = vunpack.c.h.b16 %v1844
        %v1863 = vunpack.c.l.b16 %v1845
        %v1864 = vunpack.c.h.b16 %v1845
        %v1865 = vunpack.c.l.b16 %v1846
        %v1866 = vunpack.c.h.b16 %v1846
        %v1867 = vunpack.c.l.b16 %v1847
        %v1868 = vunpack.c.h.b16 %v1847
        %v1869 = vunpack.c.l.b16 %v1848
        %v1870 = vunpack.c.h.b16 %v1848
        %v1871 = vunpack.c.l.b16 %v1849
        %v1872 = vunpack.c.h.b16 %v1849
        %v1873 = vunpack.c.l.b16 %v1850
        %v1874 = vunpack.c.h.b16 %v1850
        %v1875 = vpack.c.b16 %v1859, %v1859
        %v1876 = vpack.c.b16 %v1860, %v1860
        %v1877 = vpack.c.b16 %v1861, %v1861
        %v1878 = vpack.c.b16 %v1862, %v1862
        %v1879 = vpack.c.b16 %v1863, %v1863
        %v1880 = vpack.c.b16 %v1864, %v1864
        %v1881 = vpack.c.b16 %v1865, %v1865
        %v1882 = vpack.c.b16 %v1866, %v1866
        %v1883 = vpack.c.b16 %v1867, %v1867
        %v1884 = vpack.c.b16 %v1868, %v1868
        %v1885 = vpack.c.b16 %v1869, %v1869
        %v1886 = vpack.c.b16 %v1870, %v1870
        %v1887 = vpack.c.b16 %v1871, %v1871
        %v1888 = vpack.c.b16 %v1872, %v1872
        %v1889 = vpack.c.b16 %v1873, %v1873
        %v1890 = vpack.c.b16 %v1874, %v1874
        %1907 = vst [vmem:[%s557] sm:$0xf] %v1875
        %1908 = vst [vmem:[%s557 + $0x4] sm:$0xf] %v1876
        %1909 = vst [vmem:[%s557 + $0x8] sm:$0xf] %v1877
        %1910 = vst [vmem:[%s557 + $0xc] sm:$0xf] %v1878
        %1911 = vst [vmem:[%s557 + $0x10] sm:$0xf] %v1879
        %1912 = vst [vmem:[%s557 + $0x14] sm:$0xf] %v1880
        %1913 = vst [vmem:[%s557 + $0x18] sm:$0xf] %v1881
        %1914 = vst [vmem:[%s557 + $0x1c] sm:$0xf] %v1882
        %1915 = vst [vmem:[%s557 + $0x20] sm:$0xf] %v1883
        %1916 = vst [vmem:[%s557 + $0x24] sm:$0xf] %v1884
        %1917 = vst [vmem:[%s557 + $0x28] sm:$0xf] %v1885
        %1918 = vst [vmem:[%s557 + $0x2c] sm:$0xf] %v1886
        %1919 = vst [vmem:[%s557 + $0x30] sm:$0xf] %v1887
        %1920 = vst [vmem:[%s557 + $0x34] sm:$0xf] %v1888
        %1921 = vst [vmem:[%s557 + $0x38] sm:$0xf] %v1889
        %1922 = vst [vmem:[%s557 + $0x3c] sm:$0xf] %v1890
        %s1923 = sand.u32 %s303, 1
        %s1924 = scalar_lea.sflag [#allocation4], %s1923
        %s1925 = sand.u32 %s303, 1
        %s1926 = smul.addr %s1925, 64
        %s1927 = scalar_lea.vmem [#allocation14], %s1926
        // Predicated region
        $region93: #{tpu_custom_call.1} parent=63 // pred_check
          %p1928 = pneg %p313
        $region94: #{tpu_custom_call.1} parent=63 // pred_check_branch
          %1930 = sbr.rel (%p1928) target = $region96
        $region95: #{tpu_custom_call.1} parent=63 // pred_region
          %s1931 = smul.u32 16, %s38
          %s1933 = ssub.s32 1024, 1024
          %1934 = vsyncadd %s1924, %s1933
          %s1935 = smul.addr %s37, 32
          %s1936 = sadd.s32 %s1931, %s1935
          %s1937 = smul.addr %s1936, 64
          %s1938 = scalar_lea.hbm %s11, %s1937
          %s1939 = sshll.u32 %s1927, 4
          %s1940 = int_to_ptr.vmem [resolvable:$true] %s1939
          %1945 = dma.vmem_to_hbm [thread:$0]  %s1940, 1024, %s1938, %s1924, 64, 64, 4
        $region96: #{tpu_custom_call.1} parent=63 // pred_fallthru
          _
      $region64: #{tpu_custom_call.1} parent=5 // pred_fallthru
        _
      %p1946 = scmp.le.s32.totalorder 2, %s28
      // Predicated region
      $region97: #{tpu_custom_call.1} parent=5 // pred_check
        %p1947 = pneg %p1946
      $region98: #{tpu_custom_call.1} parent=5 // pred_check_branch
        %1949 = sbr.rel (%p1947) target = $region100
      $region99: #{tpu_custom_call.1} parent=5 // pred_region
        %s1950 = ssub.s32 %s28, 2
        // Predicated region
        $region101: #{tpu_custom_call.1} parent=99 // pred_check
          %p1951 = pneg %p319
        $region102: #{tpu_custom_call.1} parent=99 // pred_check_branch
          %1953 = sbr.rel (%p1951) target = $region104
        $region103: #{tpu_custom_call.1} parent=99 // pred_region
          %s1954 = sand.u32 %s304, 1
          %s1955 = scalar_lea.sflag [#allocation4], %s1954
          %s1956 = sand.u32 %s304, 1
          %s1957 = smul.addr %s1956, 64
          %s1958 = scalar_lea.vmem [#allocation14], %s1957
          %1959 = dma.done %s1955, 1024
        $region104: #{tpu_custom_call.1} parent=99 // pred_fallthru
          _
      $region100: #{tpu_custom_call.1} parent=5 // pred_fallthru
        _
    $region6: #{tpu_custom_call.1} parent=1 // loop_footer
      %s32 = sadd.s32 1, %s28
    $region7: #{tpu_custom_call.1} parent=1 // loop_footer_branch
      %27 = sbr.rel target = $region3
    $region8: #{tpu_custom_call.1} parent=1 // loop_exit
      _
    %1960 = vsyncpa [#allocation3], 1
    %s1961 = scalar_lea.sflag [#allocation3], 1
    %1962 = vsyncpa %s1961, 1
    %1963 = vsyncpa [#allocation6], 1
    %s1964 = scalar_lea.sflag [#allocation6], 1
    %1965 = vsyncpa %s1964, 1
    %1966 = vsyncpa [#allocation9], 1
    %1967 = vsyncpa [#allocation12], 1
    %1968 = vsyncpa [#allocation4], 1
    %s1969 = scalar_lea.sflag [#allocation4], 1
    %1970 = vsyncpa %s1969, 1

</llo_original>
